<compile_context>
chip_gen: v5e
topology: v5e:2x2
jax: 0.10.0
libtpu: 0.0.40
codegen_flags: <defaults>
</compile_context>

<pallas_src>
import jax
import jax.numpy as jnp
from jax import lax
from jax.experimental import pallas as pl
from jax.experimental.pallas import tpu as pltpu

# ---------------- problem sizes ----------------
B = 2     # logical batch
BP = 8    # padded batch (one full sublane tile)
S = 8     # sequence length
E = 32    # embedding_dim
L = 2     # number of xLSTM blocks
F = 7     # input features: 1 price + 6 time features
G = 4 * E  # packed gate width = 128 lanes
EPS = 1e-5

# ---------------- gate-weight blob layout (lanes = 4E = 128) ----------------
ROW_WX0 = 0                    # rows [0, E)          : layer-0 x-path weights  (E, 4E)
ROW_WH0 = E                    # rows [E, 2E)         : layer-0 h-path weights  (E, 4E)
# layer l >= 1 fused block [Wx_l; Wh_l] lives at rows [2E*l, 2E*(l+1))  (2E, 4E)
ROW_BG = 2 * E * L             # rows [2EL, 2EL + L)  : packed gate bias per layer (1, 4E)
GW_ROWS = 2 * E * L + L

# ---------------- misc blob layout (lanes = E = 32) ----------------
ROW_WP = 0                     # rows [0, F)          : input_proj weight (F, E)
ROW_BP = ROW_WP + F            # row  F               : input_proj bias   (1, E)
ROW_LNG = ROW_BP + 1           # rows [F+1, F+1+L)    : LayerNorm gamma per layer
ROW_LNB = ROW_LNG + L          # rows [.., .. + L)    : LayerNorm beta per layer
ROW_FCW = ROW_LNB + L          # row                  : fc weight as a (1, E) row
MISC_ROWS = ROW_FCW + 1


def stock_model_kernel(feats_ref, gw_ref, misc_ref, fcb_ref, out_ref):
    f32 = jnp.float32

    def layernorm(x, g, b):
        mu = jnp.mean(x, axis=-1, keepdims=True)
        xc = x - mu
        var = jnp.mean(xc * xc, axis=-1, keepdims=True)
        return xc * lax.rsqrt(var + EPS) * g + b

    def cell(pre, c_prev, n_prev, m_prev):
        # sLSTM cell with exponential gating + stabilizer; `pre` is the packed
        # (BP, 4E) gate pre-activation, gates unpacked with static 32-lane extracts.
        i_t = pre[:, 0 * E:1 * E]
        f_t = pre[:, 1 * E:2 * E]
        z_t = pre[:, 2 * E:3 * E]
        o_t = pre[:, 3 * E:4 * E]
        m_new = jnp.maximum(f_t + m_prev, i_t)
        i_g = jnp.exp(i_t - m_new)
        f_g = jnp.exp(f_t + m_prev - m_new)
        c_new = f_g * c_prev + i_g * jnp.tanh(z_t)
        n_new = f_g * n_prev + i_g
        # Exact division (per review); max(n, 1) guards 0/0 when n underflows.
        h_new = jax.nn.sigmoid(o_t) * c_new / jnp.maximum(n_new, 1.0)
        return h_new, c_new, n_new, m_new

    # ---- loop-invariant parameters (lane-dense packed blocks) ----
    wp = misc_ref[ROW_WP:ROW_WP + F, :]                               # (F, E)
    bp = misc_ref[ROW_BP:ROW_BP + 1, :]                               # (1, E)
    lng = [misc_ref[ROW_LNG + l:ROW_LNG + l + 1, :] for l in range(L)]
    lnb = [misc_ref[ROW_LNB + l:ROW_LNB + l + 1, :] for l in range(L)]
    fcw = misc_ref[ROW_FCW:ROW_FCW + 1, :]                            # (1, E)

    wx0 = gw_ref[ROW_WX0:ROW_WX0 + E, :]                              # (E, 4E)
    wh0 = gw_ref[ROW_WH0:ROW_WH0 + E, :]                              # (E, 4E)
    wxh = [gw_ref[2 * E * l:2 * E * (l + 1), :] for l in range(1, L)]  # (2E, 4E) each
    bg = [gw_ref[ROW_BG + l:ROW_BG + l + 1, :] for l in range(L)]     # (1, 4E) each

    # ---- input projection: one batched matmul over all S*BP rows ----
    feats = feats_ref[...].astype(f32).reshape(S * BP, F)             # (S*BP, F)
    h0 = jnp.dot(feats, wp, preferred_element_type=f32) + bp          # (S*BP, E)

    # ---- layer-0 x-path gates hoisted out of the recurrence, 128 lanes wide ----
    xn0 = layernorm(h0, lng[0], lnb[0])                               # (S*BP, E)
    gx0 = jnp.dot(xn0, wx0, preferred_element_type=f32) + bg[0]       # (S*BP, 4E)
    gx0 = gx0.reshape(S, BP, G)                                       # time-major slabs
    h0 = h0.reshape(S, BP, E)

    # ---- fused wavefront recurrence: fully unrolled, state kept in vregs ----
    zero = jnp.zeros((BP, E), f32)
    hs = [zero] * L
    cs = [zero] * L
    ns = [zero] * L
    ms = [zero] * L

    last = None
    for t in range(S):
        # layer 0, step t: x-path precomputed, one (BP,E)x(E,4E) matmul on the chain.
        pre0 = gx0[t] + jnp.dot(hs[0], wh0, preferred_element_type=f32)   # (BP, 4E)
        hs[0], cs[0], ns[0], ms[0] = cell(pre0, cs[0], ns[0], ms[0])
        h_t = h0[t] + hs[0]                                               # residual

        # layers 1..L-1, step t: single fused (BP,2E)x(2E,4E) matmul per layer.
        for l in range(1, L):
            xn_t = layernorm(h_t, lng[l], lnb[l])                         # (BP, E)
            lhs = jnp.concatenate([xn_t, hs[l]], axis=-1)                 # (BP, 2E)
            pre = jnp.dot(lhs, wxh[l - 1], preferred_element_type=f32) + bg[l]
            hs[l], cs[l], ns[l], ms[l] = cell(pre, cs[l], ns[l], ms[l])
            h_t = h_t + hs[l]                                             # residual

        if t == S - 1:
            last = h_t                                                    # (BP, E)

    # ---- head on last timestep: VPU multiply + lane reduce (no N=1 MXU matmul) ----
    out = jnp.sum(last[:B, :] * fcw, axis=-1, keepdims=True) + fcb_ref[0]  # (B, 1)
    out_ref[...] = out.astype(out_ref.dtype)


def pack_params(p):
    """Pack all parameter tensors into 2 lane-major VMEM blobs + 1 SMEM scalar.

    Called ONCE at init (hoisted out of the per-call path).
    Gate order along the 4E=128 columns is (i, f, z, o).
    """
    wx = p["wx"].astype(jnp.float32)                    # (L, E, 4E)
    wh = p["wh"].astype(jnp.float32)                    # (L, E, 4E)
    rows = [wx[0], wh[0]]                               # layer 0: separate x / h paths
    for l in range(1, L):
        rows.append(wx[l])                              # fused [Wx_l; Wh_l] block
        rows.append(wh[l])
    rows.append(p["bg"].reshape(L, G).astype(jnp.float32))
    gw = jnp.concatenate(rows, axis=0)                  # (GW_ROWS, 4E)
    assert gw.shape == (GW_ROWS, G)

    misc = jnp.concatenate(
        [
            p["wp"],                                    # (F, E)
            p["bp"],                                    # (1, E)
            p["ln_g"].reshape(L, E),                    # (L, E)
            p["ln_b"].reshape(L, E),                    # (L, E)
            p["fc_w"].T,                                # (1, E)
        ],
        axis=0,
    ).astype(jnp.float32)                               # (MISC_ROWS, E)
    assert misc.shape == (MISC_ROWS, E)

    fcb = p["fc_b"].reshape(1).astype(jnp.float32)      # (1,) scalar -> SMEM
    return gw.astype(jnp.float32), misc, fcb


@jax.jit
def stock_model_forward(x, time_features, gw, misc, fcb):
    # Thin glue fused by XLA inside this jit: concat features, go time-major,
    # pad batch 2 -> 8 so every tile in the kernel is sublane-aligned.
    feats = jnp.concatenate([x[..., None], time_features], axis=-1)    # (B, S, F)
    feats = jnp.transpose(feats, (1, 0, 2)).astype(jnp.float32)        # (S, B, F)
    feats = jnp.pad(feats, ((0, 0), (0, BP - B), (0, 0)))              # (S, BP, F)

    return pl.pallas_call(
        stock_model_kernel,
        out_shape=jax.ShapeDtypeStruct((B, 1), jnp.float32),
        in_specs=[
            pl.BlockSpec(memory_space=pltpu.MemorySpace.VMEM),   # feats  (S, BP, F)
            pl.BlockSpec(memory_space=pltpu.MemorySpace.VMEM),   # gate_w (GW_ROWS, 4E)
            pl.BlockSpec(memory_space=pltpu.MemorySpace.VMEM),   # misc   (MISC_ROWS, E)
            pl.BlockSpec(memory_space=pltpu.MemorySpace.SMEM),   # fc bias scalar
        ],
        out_specs=pl.BlockSpec(memory_space=pltpu.MemorySpace.VMEM),
    )(feats, gw, misc, fcb)


def init_params(key):
    ks = jax.random.split(key, 4)
    p = {
        # input_proj: Linear(7, E)  (stored as (in, out); PyTorch stores (out, in))
        "wp": jax.random.normal(ks[0], (F, E), jnp.float32) * (1.0 / jnp.sqrt(F)),
        "bp": jnp.zeros((1, E), jnp.float32),
        # per-block LayerNorm
        "ln_g": jnp.ones((L, 1, 1, E), jnp.float32),
        "ln_b": jnp.zeros((L, 1, 1, E), jnp.float32),
        # per-block sLSTM cell weights (gate order: i, f, z, o along 4E columns)
        "wx": jax.random.normal(ks[1], (L, E, G), jnp.float32) * (1.0 / jnp.sqrt(E)),
        "wh": jax.random.normal(ks[2], (L, E, G), jnp.float32) * (1.0 / jnp.sqrt(E)),
        "bg": jnp.zeros((L, 1, G), jnp.float32),
        # fc: Linear(E, 1)
        "fc_w": jax.random.normal(ks[3], (E, 1), jnp.float32) * (1.0 / jnp.sqrt(E)),
        "fc_b": jnp.zeros((1, 1), jnp.float32),
    }
    return p


if __name__ == "__main__":
    key = jax.random.PRNGKey(0)
    k_x, k_t, k_p = jax.random.split(key, 3)

    x = jax.random.normal(k_x, (B, S), jnp.float32)                    # price sequence
    time_features = jax.random.normal(k_t, (B, S, F - 1), jnp.float32)
    params = init_params(k_p)

    # Pack weights ONCE (hoisted out of the per-call path).
    gw, misc, fcb = pack_params(params)

    out = stock_model_forward(x, time_features, gw, misc, fcb)
    out = jax.block_until_ready(out)
    assert out.shape == (B, 1)
    assert bool(jnp.all(jnp.isfinite(out)))
    print("KERNEL_OK")
</pallas_src>

<mosaic_0001>
module attributes {stable_mosaic.version = 11 : i64} {
  func.func @stock_model_kernel(%arg0: memref<8x8x7xf32, #tpu.memory_space<vmem>>, %arg1: memref<130x128xf32, #tpu.memory_space<vmem>>, %arg2: memref<13x32xf32, #tpu.memory_space<vmem>>, %arg3: memref<1xf32, #tpu.memory_space<smem>>, %arg4: memref<2x1xf32, #tpu.memory_space<vmem>>) attributes {dimension_semantics = [], scalar_prefetch = 0 : i64, scratch_operands = 0 : i64, tpu.core_type = #tpu.core_type<tc>} {
    %c0 = arith.constant 0 : index
    %c0_0 = arith.constant 0 : index
    %0 = vector.load %arg2[%c0, %c0_0] : memref<13x32xf32, #tpu.memory_space<vmem>>, vector<7x32xf32>
    %c7 = arith.constant 7 : index
    %c0_1 = arith.constant 0 : index
    %1 = vector.load %arg2[%c7, %c0_1] : memref<13x32xf32, #tpu.memory_space<vmem>>, vector<1x32xf32>
    %c8 = arith.constant 8 : index
    %c0_2 = arith.constant 0 : index
    %2 = vector.load %arg2[%c8, %c0_2] : memref<13x32xf32, #tpu.memory_space<vmem>>, vector<1x32xf32>
    %c9 = arith.constant 9 : index
    %c0_3 = arith.constant 0 : index
    %3 = vector.load %arg2[%c9, %c0_3] : memref<13x32xf32, #tpu.memory_space<vmem>>, vector<1x32xf32>
    %c10 = arith.constant 10 : index
    %c0_4 = arith.constant 0 : index
    %4 = vector.load %arg2[%c10, %c0_4] : memref<13x32xf32, #tpu.memory_space<vmem>>, vector<1x32xf32>
    %c11 = arith.constant 11 : index
    %c0_5 = arith.constant 0 : index
    %5 = vector.load %arg2[%c11, %c0_5] : memref<13x32xf32, #tpu.memory_space<vmem>>, vector<1x32xf32>
    %c12 = arith.constant 12 : index
    %c0_6 = arith.constant 0 : index
    %6 = vector.load %arg2[%c12, %c0_6] : memref<13x32xf32, #tpu.memory_space<vmem>>, vector<1x32xf32>
    %c0_7 = arith.constant 0 : index
    %c0_8 = arith.constant 0 : index
    %7 = vector.load %arg1[%c0_7, %c0_8] : memref<130x128xf32, #tpu.memory_space<vmem>>, vector<32x128xf32>
    %c32 = arith.constant 32 : index
    %c0_9 = arith.constant 0 : index
    %8 = vector.load %arg1[%c32, %c0_9] : memref<130x128xf32, #tpu.memory_space<vmem>>, vector<32x128xf32>
    %c64 = arith.constant 64 : index
    %c0_10 = arith.constant 0 : index
    %9 = vector.load %arg1[%c64, %c0_10] : memref<130x128xf32, #tpu.memory_space<vmem>>, vector<64x128xf32>
    %c128 = arith.constant 128 : index
    %c0_11 = arith.constant 0 : index
    %10 = vector.load %arg1[%c128, %c0_11] : memref<130x128xf32, #tpu.memory_space<vmem>>, vector<1x128xf32>
    %c129 = arith.constant 129 : index
    %c0_12 = arith.constant 0 : index
    %11 = vector.load %arg1[%c129, %c0_12] : memref<130x128xf32, #tpu.memory_space<vmem>>, vector<1x128xf32>
    %c0_13 = arith.constant 0 : index
    %c0_14 = arith.constant 0 : index
    %c0_15 = arith.constant 0 : index
    %12 = vector.load %arg0[%c0_13, %c0_14, %c0_15] : memref<8x8x7xf32, #tpu.memory_space<vmem>>, vector<8x8x7xf32>
    %13 = vector.shape_cast %12 : vector<8x8x7xf32> to vector<64x7xf32>
    %cst = arith.constant dense<0.000000e+00> : vector<64x32xf32>
    %14 = tpu.matmul %13, %0, %cst {dimension_numbers = #tpu.dot_dimension_numbers<[1], [0], [0], [1], [0, 0, 1, 1], [], []>} : vector<64x7xf32>, vector<7x32xf32>, vector<64x32xf32> -> vector<64x32xf32>
    %15 = vector.broadcast %1 : vector<1x32xf32> to vector<64x32xf32>
    %16 = arith.addf %14, %15 : vector<64x32xf32>
    %cst_16 = arith.constant dense<0.000000e+00> : vector<64xf32>
    %17 = vector.multi_reduction <add>, %16, %cst_16 [1] : vector<64x32xf32> to vector<64xf32>
    %18 = vector.shape_cast %17 : vector<64xf32> to vector<64x1xf32>
    %cst_17 = arith.constant 3.200000e+01 : f32
    %19 = vector.broadcast %cst_17 : f32 to vector<64x1xf32>
    %20 = arith.divf %18, %19 : vector<64x1xf32>
    %21 = vector.broadcast %20 : vector<64x1xf32> to vector<64x32xf32>
    %22 = arith.subf %16, %21 : vector<64x32xf32>
    %23 = arith.mulf %22, %22 : vector<64x32xf32>
    %cst_18 = arith.constant dense<0.000000e+00> : vector<64xf32>
    %24 = vector.multi_reduction <add>, %23, %cst_18 [1] : vector<64x32xf32> to vector<64xf32>
    %25 = vector.shape_cast %24 : vector<64xf32> to vector<64x1xf32>
    %cst_19 = arith.constant 3.200000e+01 : f32
    %26 = vector.broadcast %cst_19 : f32 to vector<64x1xf32>
    %27 = arith.divf %25, %26 : vector<64x1xf32>
    %cst_20 = arith.constant 9.99999974E-6 : f32
    %28 = vector.broadcast %cst_20 : f32 to vector<64x1xf32>
    %29 = arith.addf %27, %28 : vector<64x1xf32>
    %30 = math.rsqrt %29 : vector<64x1xf32>
    %31 = vector.broadcast %30 : vector<64x1xf32> to vector<64x32xf32>
    %32 = arith.mulf %22, %31 : vector<64x32xf32>
    %33 = vector.broadcast %2 : vector<1x32xf32> to vector<64x32xf32>
    %34 = arith.mulf %32, %33 : vector<64x32xf32>
    %35 = vector.broadcast %4 : vector<1x32xf32> to vector<64x32xf32>
    %36 = arith.addf %34, %35 : vector<64x32xf32>
    %cst_21 = arith.constant dense<0.000000e+00> : vector<64x128xf32>
    %37 = tpu.matmul %36, %7, %cst_21 {dimension_numbers = #tpu.dot_dimension_numbers<[1], [0], [0], [1], [0, 0, 1, 1], [], []>} : vector<64x32xf32>, vector<32x128xf32>, vector<64x128xf32> -> vector<64x128xf32>
    %38 = vector.broadcast %10 : vector<1x128xf32> to vector<64x128xf32>
    %39 = arith.addf %37, %38 : vector<64x128xf32>
    %40 = vector.shape_cast %39 : vector<64x128xf32> to vector<8x8x128xf32>
    %41 = vector.shape_cast %16 : vector<64x32xf32> to vector<8x8x32xf32>
    %cst_22 = arith.constant 0.000000e+00 : f32
    %42 = vector.broadcast %cst_22 : f32 to vector<8x32xf32>
    %43 = vector.extract_strided_slice %40 {offsets = [0, 0, 0], sizes = [1, 8, 128], strides = [1, 1, 1]} : vector<8x8x128xf32> to vector<1x8x128xf32>
    %44 = vector.shape_cast %43 : vector<1x8x128xf32> to vector<8x128xf32>
    %cst_23 = arith.constant dense<0.000000e+00> : vector<8x128xf32>
    %45 = tpu.matmul %42, %8, %cst_23 {dimension_numbers = #tpu.dot_dimension_numbers<[1], [0], [0], [1], [0, 0, 1, 1], [], []>} : vector<8x32xf32>, vector<32x128xf32>, vector<8x128xf32> -> vector<8x128xf32>
    %46 = arith.addf %44, %45 : vector<8x128xf32>
    %47 = vector.extract_strided_slice %46 {offsets = [0, 0], sizes = [8, 32], strides = [1, 1]} : vector<8x128xf32> to vector<8x32xf32>
    %48 = vector.extract_strided_slice %46 {offsets = [0, 32], sizes = [8, 32], strides = [1, 1]} : vector<8x128xf32> to vector<8x32xf32>
    %49 = vector.extract_strided_slice %46 {offsets = [0, 64], sizes = [8, 32], strides = [1, 1]} : vector<8x128xf32> to vector<8x32xf32>
    %50 = vector.extract_strided_slice %46 {offsets = [0, 96], sizes = [8, 32], strides = [1, 1]} : vector<8x128xf32> to vector<8x32xf32>
    %51 = arith.addf %48, %42 : vector<8x32xf32>
    %52 = arith.maximumf %51, %47 : vector<8x32xf32>
    %53 = arith.subf %47, %52 : vector<8x32xf32>
    %54 = math.exp %53 : vector<8x32xf32>
    %55 = arith.addf %48, %42 : vector<8x32xf32>
    %56 = arith.subf %55, %52 : vector<8x32xf32>
    %57 = math.exp %56 : vector<8x32xf32>
    %58 = arith.mulf %57, %42 : vector<8x32xf32>
    %59 = math.tanh %49 : vector<8x32xf32>
    %60 = arith.mulf %54, %59 : vector<8x32xf32>
    %61 = arith.addf %58, %60 : vector<8x32xf32>
    %62 = arith.mulf %57, %42 : vector<8x32xf32>
    %63 = arith.addf %62, %54 : vector<8x32xf32>
    %64 = arith.negf %50 : vector<8x32xf32>
    %65 = math.exp %64 : vector<8x32xf32>
    %cst_24 = arith.constant 1.000000e+00 : f32
    %66 = vector.broadcast %cst_24 : f32 to vector<8x32xf32>
    %67 = arith.addf %66, %65 : vector<8x32xf32>
    %68 = arith.divf %66, %67 : vector<8x32xf32>
    %69 = arith.mulf %68, %61 : vector<8x32xf32>
    %cst_25 = arith.constant 1.000000e+00 : f32
    %70 = vector.broadcast %cst_25 : f32 to vector<8x32xf32>
    %71 = arith.maximumf %63, %70 : vector<8x32xf32>
    %72 = arith.divf %69, %71 : vector<8x32xf32>
    %73 = vector.extract_strided_slice %41 {offsets = [0, 0, 0], sizes = [1, 8, 32], strides = [1, 1, 1]} : vector<8x8x32xf32> to vector<1x8x32xf32>
    %74 = vector.shape_cast %73 : vector<1x8x32xf32> to vector<8x32xf32>
    %75 = arith.addf %74, %72 : vector<8x32xf32>
    %cst_26 = arith.constant dense<0.000000e+00> : vector<8xf32>
    %76 = vector.multi_reduction <add>, %75, %cst_26 [1] : vector<8x32xf32> to vector<8xf32>
    %77 = vector.shape_cast %76 : vector<8xf32> to vector<8x1xf32>
    %cst_27 = arith.constant 3.200000e+01 : f32
    %78 = vector.broadcast %cst_27 : f32 to vector<8x1xf32>
    %79 = arith.divf %77, %78 : vector<8x1xf32>
    %80 = vector.broadcast %79 : vector<8x1xf32> to vector<8x32xf32>
    %81 = arith.subf %75, %80 : vector<8x32xf32>
    %82 = arith.mulf %81, %81 : vector<8x32xf32>
    %cst_28 = arith.constant dense<0.000000e+00> : vector<8xf32>
    %83 = vector.multi_reduction <add>, %82, %cst_28 [1] : vector<8x32xf32> to vector<8xf32>
    %84 = vector.shape_cast %83 : vector<8xf32> to vector<8x1xf32>
    %cst_29 = arith.constant 3.200000e+01 : f32
    %85 = vector.broadcast %cst_29 : f32 to vector<8x1xf32>
    %86 = arith.divf %84, %85 : vector<8x1xf32>
    %cst_30 = arith.constant 9.99999974E-6 : f32
    %87 = vector.broadcast %cst_30 : f32 to vector<8x1xf32>
    %88 = arith.addf %86, %87 : vector<8x1xf32>
    %89 = math.rsqrt %88 : vector<8x1xf32>
    %90 = vector.broadcast %89 : vector<8x1xf32> to vector<8x32xf32>
    %91 = arith.mulf %81, %90 : vector<8x32xf32>
    %92 = vector.broadcast %3 : vector<1x32xf32> to vector<8x32xf32>
    %93 = arith.mulf %91, %92 : vector<8x32xf32>
    %94 = vector.broadcast %5 : vector<1x32xf32> to vector<8x32xf32>
    %95 = arith.addf %93, %94 : vector<8x32xf32>
    %96 = tpu.concatenate %95, %42 in 1 : vector<8x32xf32>, vector<8x32xf32> -> vector<8x64xf32>
    %cst_31 = arith.constant dense<0.000000e+00> : vector<8x128xf32>
    %97 = tpu.matmul %96, %9, %cst_31 {dimension_numbers = #tpu.dot_dimension_numbers<[1], [0], [0], [1], [0, 0, 1, 1], [], []>} : vector<8x64xf32>, vector<64x128xf32>, vector<8x128xf32> -> vector<8x128xf32>
    %98 = vector.broadcast %11 : vector<1x128xf32> to vector<8x128xf32>
    %99 = arith.addf %97, %98 : vector<8x128xf32>
    %100 = vector.extract_strided_slice %99 {offsets = [0, 0], sizes = [8, 32], strides = [1, 1]} : vector<8x128xf32> to vector<8x32xf32>
    %101 = vector.extract_strided_slice %99 {offsets = [0, 32], sizes = [8, 32], strides = [1, 1]} : vector<8x128xf32> to vector<8x32xf32>
    %102 = vector.extract_strided_slice %99 {offsets = [0, 64], sizes = [8, 32], strides = [1, 1]} : vector<8x128xf32> to vector<8x32xf32>
    %103 = vector.extract_strided_slice %99 {offsets = [0, 96], sizes = [8, 32], strides = [1, 1]} : vector<8x128xf32> to vector<8x32xf32>
    %104 = arith.addf %101, %42 : vector<8x32xf32>
    %105 = arith.maximumf %104, %100 : vector<8x32xf32>
    %106 = arith.subf %100, %105 : vector<8x32xf32>
    %107 = math.exp %106 : vector<8x32xf32>
    %108 = arith.addf %101, %42 : vector<8x32xf32>
    %109 = arith.subf %108, %105 : vector<8x32xf32>
    %110 = math.exp %109 : vector<8x32xf32>
    %111 = arith.mulf %110, %42 : vector<8x32xf32>
    %112 = math.tanh %102 : vector<8x32xf32>
    %113 = arith.mulf %107, %112 : vector<8x32xf32>
    %114 = arith.addf %111, %113 : vector<8x32xf32>
    %115 = arith.mulf %110, %42 : vector<8x32xf32>
    %116 = arith.addf %115, %107 : vector<8x32xf32>
    %117 = arith.negf %103 : vector<8x32xf32>
    %118 = math.exp %117 : vector<8x32xf32>
    %cst_32 = arith.constant 1.000000e+00 : f32
    %119 = vector.broadcast %cst_32 : f32 to vector<8x32xf32>
    %120 = arith.addf %119, %118 : vector<8x32xf32>
    %121 = arith.divf %119, %120 : vector<8x32xf32>
    %122 = arith.mulf %121, %114 : vector<8x32xf32>
    %cst_33 = arith.constant 1.000000e+00 : f32
    %123 = vector.broadcast %cst_33 : f32 to vector<8x32xf32>
    %124 = arith.maximumf %116, %123 : vector<8x32xf32>
    %125 = arith.divf %122, %124 : vector<8x32xf32>
    %126 = vector.extract_strided_slice %40 {offsets = [1, 0, 0], sizes = [1, 8, 128], strides = [1, 1, 1]} : vector<8x8x128xf32> to vector<1x8x128xf32>
    %127 = vector.shape_cast %126 : vector<1x8x128xf32> to vector<8x128xf32>
    %cst_34 = arith.constant dense<0.000000e+00> : vector<8x128xf32>
    %128 = tpu.matmul %72, %8, %cst_34 {dimension_numbers = #tpu.dot_dimension_numbers<[1], [0], [0], [1], [0, 0, 1, 1], [], []>} : vector<8x32xf32>, vector<32x128xf32>, vector<8x128xf32> -> vector<8x128xf32>
    %129 = arith.addf %127, %128 : vector<8x128xf32>
    %130 = vector.extract_strided_slice %129 {offsets = [0, 0], sizes = [8, 32], strides = [1, 1]} : vector<8x128xf32> to vector<8x32xf32>
    %131 = vector.extract_strided_slice %129 {offsets = [0, 32], sizes = [8, 32], strides = [1, 1]} : vector<8x128xf32> to vector<8x32xf32>
    %132 = vector.extract_strided_slice %129 {offsets = [0, 64], sizes = [8, 32], strides = [1, 1]} : vector<8x128xf32> to vector<8x32xf32>
    %133 = vector.extract_strided_slice %129 {offsets = [0, 96], sizes = [8, 32], strides = [1, 1]} : vector<8x128xf32> to vector<8x32xf32>
    %134 = arith.addf %131, %52 : vector<8x32xf32>
    %135 = arith.maximumf %134, %130 : vector<8x32xf32>
    %136 = arith.subf %130, %135 : vector<8x32xf32>
    %137 = math.exp %136 : vector<8x32xf32>
    %138 = arith.addf %131, %52 : vector<8x32xf32>
    %139 = arith.subf %138, %135 : vector<8x32xf32>
    %140 = math.exp %139 : vector<8x32xf32>
    %141 = arith.mulf %140, %61 : vector<8x32xf32>
    %142 = math.tanh %132 : vector<8x32xf32>
    %143 = arith.mulf %137, %142 : vector<8x32xf32>
    %144 = arith.addf %141, %143 : vector<8x32xf32>
    %145 = arith.mulf %140, %63 : vector<8x32xf32>
    %146 = arith.addf %145, %137 : vector<8x32xf32>
    %147 = arith.negf %133 : vector<8x32xf32>
    %148 = math.exp %147 : vector<8x32xf32>
    %cst_35 = arith.constant 1.000000e+00 : f32
    %149 = vector.broadcast %cst_35 : f32 to vector<8x32xf32>
    %150 = arith.addf %149, %148 : vector<8x32xf32>
    %151 = arith.divf %149, %150 : vector<8x32xf32>
    %152 = arith.mulf %151, %144 : vector<8x32xf32>
    %cst_36 = arith.constant 1.000000e+00 : f32
    %153 = vector.broadcast %cst_36 : f32 to vector<8x32xf32>
    %154 = arith.maximumf %146, %153 : vector<8x32xf32>
    %155 = arith.divf %152, %154 : vector<8x32xf32>
    %156 = vector.extract_strided_slice %41 {offsets = [1, 0, 0], sizes = [1, 8, 32], strides = [1, 1, 1]} : vector<8x8x32xf32> to vector<1x8x32xf32>
    %157 = vector.shape_cast %156 : vector<1x8x32xf32> to vector<8x32xf32>
    %158 = arith.addf %157, %155 : vector<8x32xf32>
    %cst_37 = arith.constant dense<0.000000e+00> : vector<8xf32>
    %159 = vector.multi_reduction <add>, %158, %cst_37 [1] : vector<8x32xf32> to vector<8xf32>
    %160 = vector.shape_cast %159 : vector<8xf32> to vector<8x1xf32>
    %cst_38 = arith.constant 3.200000e+01 : f32
    %161 = vector.broadcast %cst_38 : f32 to vector<8x1xf32>
    %162 = arith.divf %160, %161 : vector<8x1xf32>
    %163 = vector.broadcast %162 : vector<8x1xf32> to vector<8x32xf32>
    %164 = arith.subf %158, %163 : vector<8x32xf32>
    %165 = arith.mulf %164, %164 : vector<8x32xf32>
    %cst_39 = arith.constant dense<0.000000e+00> : vector<8xf32>
    %166 = vector.multi_reduction <add>, %165, %cst_39 [1] : vector<8x32xf32> to vector<8xf32>
    %167 = vector.shape_cast %166 : vector<8xf32> to vector<8x1xf32>
    %cst_40 = arith.constant 3.200000e+01 : f32
    %168 = vector.broadcast %cst_40 : f32 to vector<8x1xf32>
    %169 = arith.divf %167, %168 : vector<8x1xf32>
    %cst_41 = arith.constant 9.99999974E-6 : f32
    %170 = vector.broadcast %cst_41 : f32 to vector<8x1xf32>
    %171 = arith.addf %169, %170 : vector<8x1xf32>
    %172 = math.rsqrt %171 : vector<8x1xf32>
    %173 = vector.broadcast %172 : vector<8x1xf32> to vector<8x32xf32>
    %174 = arith.mulf %164, %173 : vector<8x32xf32>
    %175 = vector.broadcast %3 : vector<1x32xf32> to vector<8x32xf32>
    %176 = arith.mulf %174, %175 : vector<8x32xf32>
    %177 = vector.broadcast %5 : vector<1x32xf32> to vector<8x32xf32>
    %178 = arith.addf %176, %177 : vector<8x32xf32>
    %179 = tpu.concatenate %178, %125 in 1 : vector<8x32xf32>, vector<8x32xf32> -> vector<8x64xf32>
    %cst_42 = arith.constant dense<0.000000e+00> : vector<8x128xf32>
    %180 = tpu.matmul %179, %9, %cst_42 {dimension_numbers = #tpu.dot_dimension_numbers<[1], [0], [0], [1], [0, 0, 1, 1], [], []>} : vector<8x64xf32>, vector<64x128xf32>, vector<8x128xf32> -> vector<8x128xf32>
    %181 = vector.broadcast %11 : vector<1x128xf32> to vector<8x128xf32>
    %182 = arith.addf %180, %181 : vector<8x128xf32>
    %183 = vector.extract_strided_slice %182 {offsets = [0, 0], sizes = [8, 32], strides = [1, 1]} : vector<8x128xf32> to vector<8x32xf32>
    %184 = vector.extract_strided_slice %182 {offsets = [0, 32], sizes = [8, 32], strides = [1, 1]} : vector<8x128xf32> to vector<8x32xf32>
    %185 = vector.extract_strided_slice %182 {offsets = [0, 64], sizes = [8, 32], strides = [1, 1]} : vector<8x128xf32> to vector<8x32xf32>
    %186 = vector.extract_strided_slice %182 {offsets = [0, 96], sizes = [8, 32], strides = [1, 1]} : vector<8x128xf32> to vector<8x32xf32>
    %187 = arith.addf %184, %105 : vector<8x32xf32>
    %188 = arith.maximumf %187, %183 : vector<8x32xf32>
    %189 = arith.subf %183, %188 : vector<8x32xf32>
    %190 = math.exp %189 : vector<8x32xf32>
    %191 = arith.addf %184, %105 : vector<8x32xf32>
    %192 = arith.subf %191, %188 : vector<8x32xf32>
    %193 = math.exp %192 : vector<8x32xf32>
    %194 = arith.mulf %193, %114 : vector<8x32xf32>
    %195 = math.tanh %185 : vector<8x32xf32>
    %196 = arith.mulf %190, %195 : vector<8x32xf32>
    %197 = arith.addf %194, %196 : vector<8x32xf32>
    %198 = arith.mulf %193, %116 : vector<8x32xf32>
    %199 = arith.addf %198, %190 : vector<8x32xf32>
    %200 = arith.negf %186 : vector<8x32xf32>
    %201 = math.exp %200 : vector<8x32xf32>
    %cst_43 = arith.constant 1.000000e+00 : f32
    %202 = vector.broadcast %cst_43 : f32 to vector<8x32xf32>
    %203 = arith.addf %202, %201 : vector<8x32xf32>
    %204 = arith.divf %202, %203 : vector<8x32xf32>
    %205 = arith.mulf %204, %197 : vector<8x32xf32>
    %cst_44 = arith.constant 1.000000e+00 : f32
    %206 = vector.broadcast %cst_44 : f32 to vector<8x32xf32>
    %207 = arith.maximumf %199, %206 : vector<8x32xf32>
    %208 = arith.divf %205, %207 : vector<8x32xf32>
    %209 = vector.extract_strided_slice %40 {offsets = [2, 0, 0], sizes = [1, 8, 128], strides = [1, 1, 1]} : vector<8x8x128xf32> to vector<1x8x128xf32>
    %210 = vector.shape_cast %209 : vector<1x8x128xf32> to vector<8x128xf32>
    %cst_45 = arith.constant dense<0.000000e+00> : vector<8x128xf32>
    %211 = tpu.matmul %155, %8, %cst_45 {dimension_numbers = #tpu.dot_dimension_numbers<[1], [0], [0], [1], [0, 0, 1, 1], [], []>} : vector<8x32xf32>, vector<32x128xf32>, vector<8x128xf32> -> vector<8x128xf32>
    %212 = arith.addf %210, %211 : vector<8x128xf32>
    %213 = vector.extract_strided_slice %212 {offsets = [0, 0], sizes = [8, 32], strides = [1, 1]} : vector<8x128xf32> to vector<8x32xf32>
    %214 = vector.extract_strided_slice %212 {offsets = [0, 32], sizes = [8, 32], strides = [1, 1]} : vector<8x128xf32> to vector<8x32xf32>
    %215 = vector.extract_strided_slice %212 {offsets = [0, 64], sizes = [8, 32], strides = [1, 1]} : vector<8x128xf32> to vector<8x32xf32>
    %216 = vector.extract_strided_slice %212 {offsets = [0, 96], sizes = [8, 32], strides = [1, 1]} : vector<8x128xf32> to vector<8x32xf32>
    %217 = arith.addf %214, %135 : vector<8x32xf32>
    %218 = arith.maximumf %217, %213 : vector<8x32xf32>
    %219 = arith.subf %213, %218 : vector<8x32xf32>
    %220 = math.exp %219 : vector<8x32xf32>
    %221 = arith.addf %214, %135 : vector<8x32xf32>
    %222 = arith.subf %221, %218 : vector<8x32xf32>
    %223 = math.exp %222 : vector<8x32xf32>
    %224 = arith.mulf %223, %144 : vector<8x32xf32>
    %225 = math.tanh %215 : vector<8x32xf32>
    %226 = arith.mulf %220, %225 : vector<8x32xf32>
    %227 = arith.addf %224, %226 : vector<8x32xf32>
    %228 = arith.mulf %223, %146 : vector<8x32xf32>
    %229 = arith.addf %228, %220 : vector<8x32xf32>
    %230 = arith.negf %216 : vector<8x32xf32>
    %231 = math.exp %230 : vector<8x32xf32>
    %cst_46 = arith.constant 1.000000e+00 : f32
    %232 = vector.broadcast %cst_46 : f32 to vector<8x32xf32>
    %233 = arith.addf %232, %231 : vector<8x32xf32>
    %234 = arith.divf %232, %233 : vector<8x32xf32>
    %235 = arith.mulf %234, %227 : vector<8x32xf32>
    %cst_47 = arith.constant 1.000000e+00 : f32
    %236 = vector.broadcast %cst_47 : f32 to vector<8x32xf32>
    %237 = arith.maximumf %229, %236 : vector<8x32xf32>
    %238 = arith.divf %235, %237 : vector<8x32xf32>
    %239 = vector.extract_strided_slice %41 {offsets = [2, 0, 0], sizes = [1, 8, 32], strides = [1, 1, 1]} : vector<8x8x32xf32> to vector<1x8x32xf32>
    %240 = vector.shape_cast %239 : vector<1x8x32xf32> to vector<8x32xf32>
    %241 = arith.addf %240, %238 : vector<8x32xf32>
    %cst_48 = arith.constant dense<0.000000e+00> : vector<8xf32>
    %242 = vector.multi_reduction <add>, %241, %cst_48 [1] : vector<8x32xf32> to vector<8xf32>
    %243 = vector.shape_cast %242 : vector<8xf32> to vector<8x1xf32>
    %cst_49 = arith.constant 3.200000e+01 : f32
    %244 = vector.broadcast %cst_49 : f32 to vector<8x1xf32>
    %245 = arith.divf %243, %244 : vector<8x1xf32>
    %246 = vector.broadcast %245 : vector<8x1xf32> to vector<8x32xf32>
    %247 = arith.subf %241, %246 : vector<8x32xf32>
    %248 = arith.mulf %247, %247 : vector<8x32xf32>
    %cst_50 = arith.constant dense<0.000000e+00> : vector<8xf32>
    %249 = vector.multi_reduction <add>, %248, %cst_50 [1] : vector<8x32xf32> to vector<8xf32>
    %250 = vector.shape_cast %249 : vector<8xf32> to vector<8x1xf32>
    %cst_51 = arith.constant 3.200000e+01 : f32
    %251 = vector.broadcast %cst_51 : f32 to vector<8x1xf32>
    %252 = arith.divf %250, %251 : vector<8x1xf32>
    %cst_52 = arith.constant 9.99999974E-6 : f32
    %253 = vector.broadcast %cst_52 : f32 to vector<8x1xf32>
    %254 = arith.addf %252, %253 : vector<8x1xf32>
    %255 = math.rsqrt %254 : vector<8x1xf32>
    %256 = vector.broadcast %255 : vector<8x1xf32> to vector<8x32xf32>
    %257 = arith.mulf %247, %256 : vector<8x32xf32>
    %258 = vector.broadcast %3 : vector<1x32xf32> to vector<8x32xf32>
    %259 = arith.mulf %257, %258 : vector<8x32xf32>
    %260 = vector.broadcast %5 : vector<1x32xf32> to vector<8x32xf32>
    %261 = arith.addf %259, %260 : vector<8x32xf32>
    %262 = tpu.concatenate %261, %208 in 1 : vector<8x32xf32>, vector<8x32xf32> -> vector<8x64xf32>
    %cst_53 = arith.constant dense<0.000000e+00> : vector<8x128xf32>
    %263 = tpu.matmul %262, %9, %cst_53 {dimension_numbers = #tpu.dot_dimension_numbers<[1], [0], [0], [1], [0, 0, 1, 1], [], []>} : vector<8x64xf32>, vector<64x128xf32>, vector<8x128xf32> -> vector<8x128xf32>
    %264 = vector.broadcast %11 : vector<1x128xf32> to vector<8x128xf32>
    %265 = arith.addf %263, %264 : vector<8x128xf32>
    %266 = vector.extract_strided_slice %265 {offsets = [0, 0], sizes = [8, 32], strides = [1, 1]} : vector<8x128xf32> to vector<8x32xf32>
    %267 = vector.extract_strided_slice %265 {offsets = [0, 32], sizes = [8, 32], strides = [1, 1]} : vector<8x128xf32> to vector<8x32xf32>
    %268 = vector.extract_strided_slice %265 {offsets = [0, 64], sizes = [8, 32], strides = [1, 1]} : vector<8x128xf32> to vector<8x32xf32>
    %269 = vector.extract_strided_slice %265 {offsets = [0, 96], sizes = [8, 32], strides = [1, 1]} : vector<8x128xf32> to vector<8x32xf32>
    %270 = arith.addf %267, %188 : vector<8x32xf32>
    %271 = arith.maximumf %270, %266 : vector<8x32xf32>
    %272 = arith.subf %266, %271 : vector<8x32xf32>
    %273 = math.exp %272 : vector<8x32xf32>
    %274 = arith.addf %267, %188 : vector<8x32xf32>
    %275 = arith.subf %274, %271 : vector<8x32xf32>
    %276 = math.exp %275 : vector<8x32xf32>
    %277 = arith.mulf %276, %197 : vector<8x32xf32>
    %278 = math.tanh %268 : vector<8x32xf32>
    %279 = arith.mulf %273, %278 : vector<8x32xf32>
    %280 = arith.addf %277, %279 : vector<8x32xf32>
    %281 = arith.mulf %276, %199 : vector<8x32xf32>
    %282 = arith.addf %281, %273 : vector<8x32xf32>
    %283 = arith.negf %269 : vector<8x32xf32>
    %284 = math.exp %283 : vector<8x32xf32>
    %cst_54 = arith.constant 1.000000e+00 : f32
    %285 = vector.broadcast %cst_54 : f32 to vector<8x32xf32>
    %286 = arith.addf %285, %284 : vector<8x32xf32>
    %287 = arith.divf %285, %286 : vector<8x32xf32>
    %288 = arith.mulf %287, %280 : vector<8x32xf32>
    %cst_55 = arith.constant 1.000000e+00 : f32
    %289 = vector.broadcast %cst_55 : f32 to vector<8x32xf32>
    %290 = arith.maximumf %282, %289 : vector<8x32xf32>
    %291 = arith.divf %288, %290 : vector<8x32xf32>
    %292 = vector.extract_strided_slice %40 {offsets = [3, 0, 0], sizes = [1, 8, 128], strides = [1, 1, 1]} : vector<8x8x128xf32> to vector<1x8x128xf32>
    %293 = vector.shape_cast %292 : vector<1x8x128xf32> to vector<8x128xf32>
    %cst_56 = arith.constant dense<0.000000e+00> : vector<8x128xf32>
    %294 = tpu.matmul %238, %8, %cst_56 {dimension_numbers = #tpu.dot_dimension_numbers<[1], [0], [0], [1], [0, 0, 1, 1], [], []>} : vector<8x32xf32>, vector<32x128xf32>, vector<8x128xf32> -> vector<8x128xf32>
    %295 = arith.addf %293, %294 : vector<8x128xf32>
    %296 = vector.extract_strided_slice %295 {offsets = [0, 0], sizes = [8, 32], strides = [1, 1]} : vector<8x128xf32> to vector<8x32xf32>
    %297 = vector.extract_strided_slice %295 {offsets = [0, 32], sizes = [8, 32], strides = [1, 1]} : vector<8x128xf32> to vector<8x32xf32>
    %298 = vector.extract_strided_slice %295 {offsets = [0, 64], sizes = [8, 32], strides = [1, 1]} : vector<8x128xf32> to vector<8x32xf32>
    %299 = vector.extract_strided_slice %295 {offsets = [0, 96], sizes = [8, 32], strides = [1, 1]} : vector<8x128xf32> to vector<8x32xf32>
    %300 = arith.addf %297, %218 : vector<8x32xf32>
    %301 = arith.maximumf %300, %296 : vector<8x32xf32>
    %302 = arith.subf %296, %301 : vector<8x32xf32>
    %303 = math.exp %302 : vector<8x32xf32>
    %304 = arith.addf %297, %218 : vector<8x32xf32>
    %305 = arith.subf %304, %301 : vector<8x32xf32>
    %306 = math.exp %305 : vector<8x32xf32>
    %307 = arith.mulf %306, %227 : vector<8x32xf32>
    %308 = math.tanh %298 : vector<8x32xf32>
    %309 = arith.mulf %303, %308 : vector<8x32xf32>
    %310 = arith.addf %307, %309 : vector<8x32xf32>
    %311 = arith.mulf %306, %229 : vector<8x32xf32>
    %312 = arith.addf %311, %303 : vector<8x32xf32>
    %313 = arith.negf %299 : vector<8x32xf32>
    %314 = math.exp %313 : vector<8x32xf32>
    %cst_57 = arith.constant 1.000000e+00 : f32
    %315 = vector.broadcast %cst_57 : f32 to vector<8x32xf32>
    %316 = arith.addf %315, %314 : vector<8x32xf32>
    %317 = arith.divf %315, %316 : vector<8x32xf32>
    %318 = arith.mulf %317, %310 : vector<8x32xf32>
    %cst_58 = arith.constant 1.000000e+00 : f32
    %319 = vector.broadcast %cst_58 : f32 to vector<8x32xf32>
    %320 = arith.maximumf %312, %319 : vector<8x32xf32>
    %321 = arith.divf %318, %320 : vector<8x32xf32>
    %322 = vector.extract_strided_slice %41 {offsets = [3, 0, 0], sizes = [1, 8, 32], strides = [1, 1, 1]} : vector<8x8x32xf32> to vector<1x8x32xf32>
    %323 = vector.shape_cast %322 : vector<1x8x32xf32> to vector<8x32xf32>
    %324 = arith.addf %323, %321 : vector<8x32xf32>
    %cst_59 = arith.constant dense<0.000000e+00> : vector<8xf32>
    %325 = vector.multi_reduction <add>, %324, %cst_59 [1] : vector<8x32xf32> to vector<8xf32>
    %326 = vector.shape_cast %325 : vector<8xf32> to vector<8x1xf32>
    %cst_60 = arith.constant 3.200000e+01 : f32
    %327 = vector.broadcast %cst_60 : f32 to vector<8x1xf32>
    %328 = arith.divf %326, %327 : vector<8x1xf32>
    %329 = vector.broadcast %328 : vector<8x1xf32> to vector<8x32xf32>
    %330 = arith.subf %324, %329 : vector<8x32xf32>
    %331 = arith.mulf %330, %330 : vector<8x32xf32>
    %cst_61 = arith.constant dense<0.000000e+00> : vector<8xf32>
    %332 = vector.multi_reduction <add>, %331, %cst_61 [1] : vector<8x32xf32> to vector<8xf32>
    %333 = vector.shape_cast %332 : vector<8xf32> to vector<8x1xf32>
    %cst_62 = arith.constant 3.200000e+01 : f32
    %334 = vector.broadcast %cst_62 : f32 to vector<8x1xf32>
    %335 = arith.divf %333, %334 : vector<8x1xf32>
    %cst_63 = arith.constant 9.99999974E-6 : f32
    %336 = vector.broadcast %cst_63 : f32 to vector<8x1xf32>
    %337 = arith.addf %335, %336 : vector<8x1xf32>
    %338 = math.rsqrt %337 : vector<8x1xf32>
    %339 = vector.broadcast %338 : vector<8x1xf32> to vector<8x32xf32>
    %340 = arith.mulf %330, %339 : vector<8x32xf32>
    %341 = vector.broadcast %3 : vector<1x32xf32> to vector<8x32xf32>
    %342 = arith.mulf %340, %341 : vector<8x32xf32>
    %343 = vector.broadcast %5 : vector<1x32xf32> to vector<8x32xf32>
    %344 = arith.addf %342, %343 : vector<8x32xf32>
    %345 = tpu.concatenate %344, %291 in 1 : vector<8x32xf32>, vector<8x32xf32> -> vector<8x64xf32>
    %cst_64 = arith.constant dense<0.000000e+00> : vector<8x128xf32>
    %346 = tpu.matmul %345, %9, %cst_64 {dimension_numbers = #tpu.dot_dimension_numbers<[1], [0], [0], [1], [0, 0, 1, 1], [], []>} : vector<8x64xf32>, vector<64x128xf32>, vector<8x128xf32> -> vector<8x128xf32>
    %347 = vector.broadcast %11 : vector<1x128xf32> to vector<8x128xf32>
    %348 = arith.addf %346, %347 : vector<8x128xf32>
    %349 = vector.extract_strided_slice %348 {offsets = [0, 0], sizes = [8, 32], strides = [1, 1]} : vector<8x128xf32> to vector<8x32xf32>
    %350 = vector.extract_strided_slice %348 {offsets = [0, 32], sizes = [8, 32], strides = [1, 1]} : vector<8x128xf32> to vector<8x32xf32>
    %351 = vector.extract_strided_slice %348 {offsets = [0, 64], sizes = [8, 32], strides = [1, 1]} : vector<8x128xf32> to vector<8x32xf32>
    %352 = vector.extract_strided_slice %348 {offsets = [0, 96], sizes = [8, 32], strides = [1, 1]} : vector<8x128xf32> to vector<8x32xf32>
    %353 = arith.addf %350, %271 : vector<8x32xf32>
    %354 = arith.maximumf %353, %349 : vector<8x32xf32>
    %355 = arith.subf %349, %354 : vector<8x32xf32>
    %356 = math.exp %355 : vector<8x32xf32>
    %357 = arith.addf %350, %271 : vector<8x32xf32>
    %358 = arith.subf %357, %354 : vector<8x32xf32>
    %359 = math.exp %358 : vector<8x32xf32>
    %360 = arith.mulf %359, %280 : vector<8x32xf32>
    %361 = math.tanh %351 : vector<8x32xf32>
    %362 = arith.mulf %356, %361 : vector<8x32xf32>
    %363 = arith.addf %360, %362 : vector<8x32xf32>
    %364 = arith.mulf %359, %282 : vector<8x32xf32>
    %365 = arith.addf %364, %356 : vector<8x32xf32>
    %366 = arith.negf %352 : vector<8x32xf32>
    %367 = math.exp %366 : vector<8x32xf32>
    %cst_65 = arith.constant 1.000000e+00 : f32
    %368 = vector.broadcast %cst_65 : f32 to vector<8x32xf32>
    %369 = arith.addf %368, %367 : vector<8x32xf32>
    %370 = arith.divf %368, %369 : vector<8x32xf32>
    %371 = arith.mulf %370, %363 : vector<8x32xf32>
    %cst_66 = arith.constant 1.000000e+00 : f32
    %372 = vector.broadcast %cst_66 : f32 to vector<8x32xf32>
    %373 = arith.maximumf %365, %372 : vector<8x32xf32>
    %374 = arith.divf %371, %373 : vector<8x32xf32>
    %375 = vector.extract_strided_slice %40 {offsets = [4, 0, 0], sizes = [1, 8, 128], strides = [1, 1, 1]} : vector<8x8x128xf32> to vector<1x8x128xf32>
    %376 = vector.shape_cast %375 : vector<1x8x128xf32> to vector<8x128xf32>
    %cst_67 = arith.constant dense<0.000000e+00> : vector<8x128xf32>
    %377 = tpu.matmul %321, %8, %cst_67 {dimension_numbers = #tpu.dot_dimension_numbers<[1], [0], [0], [1], [0, 0, 1, 1], [], []>} : vector<8x32xf32>, vector<32x128xf32>, vector<8x128xf32> -> vector<8x128xf32>
    %378 = arith.addf %376, %377 : vector<8x128xf32>
    %379 = vector.extract_strided_slice %378 {offsets = [0, 0], sizes = [8, 32], strides = [1, 1]} : vector<8x128xf32> to vector<8x32xf32>
    %380 = vector.extract_strided_slice %378 {offsets = [0, 32], sizes = [8, 32], strides = [1, 1]} : vector<8x128xf32> to vector<8x32xf32>
    %381 = vector.extract_strided_slice %378 {offsets = [0, 64], sizes = [8, 32], strides = [1, 1]} : vector<8x128xf32> to vector<8x32xf32>
    %382 = vector.extract_strided_slice %378 {offsets = [0, 96], sizes = [8, 32], strides = [1, 1]} : vector<8x128xf32> to vector<8x32xf32>
    %383 = arith.addf %380, %301 : vector<8x32xf32>
    %384 = arith.maximumf %383, %379 : vector<8x32xf32>
    %385 = arith.subf %379, %384 : vector<8x32xf32>
    %386 = math.exp %385 : vector<8x32xf32>
    %387 = arith.addf %380, %301 : vector<8x32xf32>
    %388 = arith.subf %387, %384 : vector<8x32xf32>
    %389 = math.exp %388 : vector<8x32xf32>
    %390 = arith.mulf %389, %310 : vector<8x32xf32>
    %391 = math.tanh %381 : vector<8x32xf32>
    %392 = arith.mulf %386, %391 : vector<8x32xf32>
    %393 = arith.addf %390, %392 : vector<8x32xf32>
    %394 = arith.mulf %389, %312 : vector<8x32xf32>
    %395 = arith.addf %394, %386 : vector<8x32xf32>
    %396 = arith.negf %382 : vector<8x32xf32>
    %397 = math.exp %396 : vector<8x32xf32>
    %cst_68 = arith.constant 1.000000e+00 : f32
    %398 = vector.broadcast %cst_68 : f32 to vector<8x32xf32>
    %399 = arith.addf %398, %397 : vector<8x32xf32>
    %400 = arith.divf %398, %399 : vector<8x32xf32>
    %401 = arith.mulf %400, %393 : vector<8x32xf32>
    %cst_69 = arith.constant 1.000000e+00 : f32
    %402 = vector.broadcast %cst_69 : f32 to vector<8x32xf32>
    %403 = arith.maximumf %395, %402 : vector<8x32xf32>
    %404 = arith.divf %401, %403 : vector<8x32xf32>
    %405 = vector.extract_strided_slice %41 {offsets = [4, 0, 0], sizes = [1, 8, 32], strides = [1, 1, 1]} : vector<8x8x32xf32> to vector<1x8x32xf32>
    %406 = vector.shape_cast %405 : vector<1x8x32xf32> to vector<8x32xf32>
    %407 = arith.addf %406, %404 : vector<8x32xf32>
    %cst_70 = arith.constant dense<0.000000e+00> : vector<8xf32>
    %408 = vector.multi_reduction <add>, %407, %cst_70 [1] : vector<8x32xf32> to vector<8xf32>
    %409 = vector.shape_cast %408 : vector<8xf32> to vector<8x1xf32>
    %cst_71 = arith.constant 3.200000e+01 : f32
    %410 = vector.broadcast %cst_71 : f32 to vector<8x1xf32>
    %411 = arith.divf %409, %410 : vector<8x1xf32>
    %412 = vector.broadcast %411 : vector<8x1xf32> to vector<8x32xf32>
    %413 = arith.subf %407, %412 : vector<8x32xf32>
    %414 = arith.mulf %413, %413 : vector<8x32xf32>
    %cst_72 = arith.constant dense<0.000000e+00> : vector<8xf32>
    %415 = vector.multi_reduction <add>, %414, %cst_72 [1] : vector<8x32xf32> to vector<8xf32>
    %416 = vector.shape_cast %415 : vector<8xf32> to vector<8x1xf32>
    %cst_73 = arith.constant 3.200000e+01 : f32
    %417 = vector.broadcast %cst_73 : f32 to vector<8x1xf32>
    %418 = arith.divf %416, %417 : vector<8x1xf32>
    %cst_74 = arith.constant 9.99999974E-6 : f32
    %419 = vector.broadcast %cst_74 : f32 to vector<8x1xf32>
    %420 = arith.addf %418, %419 : vector<8x1xf32>
    %421 = math.rsqrt %420 : vector<8x1xf32>
    %422 = vector.broadcast %421 : vector<8x1xf32> to vector<8x32xf32>
    %423 = arith.mulf %413, %422 : vector<8x32xf32>
    %424 = vector.broadcast %3 : vector<1x32xf32> to vector<8x32xf32>
    %425 = arith.mulf %423, %424 : vector<8x32xf32>
    %426 = vector.broadcast %5 : vector<1x32xf32> to vector<8x32xf32>
    %427 = arith.addf %425, %426 : vector<8x32xf32>
    %428 = tpu.concatenate %427, %374 in 1 : vector<8x32xf32>, vector<8x32xf32> -> vector<8x64xf32>
    %cst_75 = arith.constant dense<0.000000e+00> : vector<8x128xf32>
    %429 = tpu.matmul %428, %9, %cst_75 {dimension_numbers = #tpu.dot_dimension_numbers<[1], [0], [0], [1], [0, 0, 1, 1], [], []>} : vector<8x64xf32>, vector<64x128xf32>, vector<8x128xf32> -> vector<8x128xf32>
    %430 = vector.broadcast %11 : vector<1x128xf32> to vector<8x128xf32>
    %431 = arith.addf %429, %430 : vector<8x128xf32>
    %432 = vector.extract_strided_slice %431 {offsets = [0, 0], sizes = [8, 32], strides = [1, 1]} : vector<8x128xf32> to vector<8x32xf32>
    %433 = vector.extract_strided_slice %431 {offsets = [0, 32], sizes = [8, 32], strides = [1, 1]} : vector<8x128xf32> to vector<8x32xf32>
    %434 = vector.extract_strided_slice %431 {offsets = [0, 64], sizes = [8, 32], strides = [1, 1]} : vector<8x128xf32> to vector<8x32xf32>
    %435 = vector.extract_strided_slice %431 {offsets = [0, 96], sizes = [8, 32], strides = [1, 1]} : vector<8x128xf32> to vector<8x32xf32>
    %436 = arith.addf %433, %354 : vector<8x32xf32>
    %437 = arith.maximumf %436, %432 : vector<8x32xf32>
    %438 = arith.subf %432, %437 : vector<8x32xf32>
    %439 = math.exp %438 : vector<8x32xf32>
    %440 = arith.addf %433, %354 : vector<8x32xf32>
    %441 = arith.subf %440, %437 : vector<8x32xf32>
    %442 = math.exp %441 : vector<8x32xf32>
    %443 = arith.mulf %442, %363 : vector<8x32xf32>
    %444 = math.tanh %434 : vector<8x32xf32>
    %445 = arith.mulf %439, %444 : vector<8x32xf32>
    %446 = arith.addf %443, %445 : vector<8x32xf32>
    %447 = arith.mulf %442, %365 : vector<8x32xf32>
    %448 = arith.addf %447, %439 : vector<8x32xf32>
    %449 = arith.negf %435 : vector<8x32xf32>
    %450 = math.exp %449 : vector<8x32xf32>
    %cst_76 = arith.constant 1.000000e+00 : f32
    %451 = vector.broadcast %cst_76 : f32 to vector<8x32xf32>
    %452 = arith.addf %451, %450 : vector<8x32xf32>
    %453 = arith.divf %451, %452 : vector<8x32xf32>
    %454 = arith.mulf %453, %446 : vector<8x32xf32>
    %cst_77 = arith.constant 1.000000e+00 : f32
    %455 = vector.broadcast %cst_77 : f32 to vector<8x32xf32>
    %456 = arith.maximumf %448, %455 : vector<8x32xf32>
    %457 = arith.divf %454, %456 : vector<8x32xf32>
    %458 = vector.extract_strided_slice %40 {offsets = [5, 0, 0], sizes = [1, 8, 128], strides = [1, 1, 1]} : vector<8x8x128xf32> to vector<1x8x128xf32>
    %459 = vector.shape_cast %458 : vector<1x8x128xf32> to vector<8x128xf32>
    %cst_78 = arith.constant dense<0.000000e+00> : vector<8x128xf32>
    %460 = tpu.matmul %404, %8, %cst_78 {dimension_numbers = #tpu.dot_dimension_numbers<[1], [0], [0], [1], [0, 0, 1, 1], [], []>} : vector<8x32xf32>, vector<32x128xf32>, vector<8x128xf32> -> vector<8x128xf32>
    %461 = arith.addf %459, %460 : vector<8x128xf32>
    %462 = vector.extract_strided_slice %461 {offsets = [0, 0], sizes = [8, 32], strides = [1, 1]} : vector<8x128xf32> to vector<8x32xf32>
    %463 = vector.extract_strided_slice %461 {offsets = [0, 32], sizes = [8, 32], strides = [1, 1]} : vector<8x128xf32> to vector<8x32xf32>
    %464 = vector.extract_strided_slice %461 {offsets = [0, 64], sizes = [8, 32], strides = [1, 1]} : vector<8x128xf32> to vector<8x32xf32>
    %465 = vector.extract_strided_slice %461 {offsets = [0, 96], sizes = [8, 32], strides = [1, 1]} : vector<8x128xf32> to vector<8x32xf32>
    %466 = arith.addf %463, %384 : vector<8x32xf32>
    %467 = arith.maximumf %466, %462 : vector<8x32xf32>
    %468 = arith.subf %462, %467 : vector<8x32xf32>
    %469 = math.exp %468 : vector<8x32xf32>
    %470 = arith.addf %463, %384 : vector<8x32xf32>
    %471 = arith.subf %470, %467 : vector<8x32xf32>
    %472 = math.exp %471 : vector<8x32xf32>
    %473 = arith.mulf %472, %393 : vector<8x32xf32>
    %474 = math.tanh %464 : vector<8x32xf32>
    %475 = arith.mulf %469, %474 : vector<8x32xf32>
    %476 = arith.addf %473, %475 : vector<8x32xf32>
    %477 = arith.mulf %472, %395 : vector<8x32xf32>
    %478 = arith.addf %477, %469 : vector<8x32xf32>
    %479 = arith.negf %465 : vector<8x32xf32>
    %480 = math.exp %479 : vector<8x32xf32>
    %cst_79 = arith.constant 1.000000e+00 : f32
    %481 = vector.broadcast %cst_79 : f32 to vector<8x32xf32>
    %482 = arith.addf %481, %480 : vector<8x32xf32>
    %483 = arith.divf %481, %482 : vector<8x32xf32>
    %484 = arith.mulf %483, %476 : vector<8x32xf32>
    %cst_80 = arith.constant 1.000000e+00 : f32
    %485 = vector.broadcast %cst_80 : f32 to vector<8x32xf32>
    %486 = arith.maximumf %478, %485 : vector<8x32xf32>
    %487 = arith.divf %484, %486 : vector<8x32xf32>
    %488 = vector.extract_strided_slice %41 {offsets = [5, 0, 0], sizes = [1, 8, 32], strides = [1, 1, 1]} : vector<8x8x32xf32> to vector<1x8x32xf32>
    %489 = vector.shape_cast %488 : vector<1x8x32xf32> to vector<8x32xf32>
    %490 = arith.addf %489, %487 : vector<8x32xf32>
    %cst_81 = arith.constant dense<0.000000e+00> : vector<8xf32>
    %491 = vector.multi_reduction <add>, %490, %cst_81 [1] : vector<8x32xf32> to vector<8xf32>
    %492 = vector.shape_cast %491 : vector<8xf32> to vector<8x1xf32>
    %cst_82 = arith.constant 3.200000e+01 : f32
    %493 = vector.broadcast %cst_82 : f32 to vector<8x1xf32>
    %494 = arith.divf %492, %493 : vector<8x1xf32>
    %495 = vector.broadcast %494 : vector<8x1xf32> to vector<8x32xf32>
    %496 = arith.subf %490, %495 : vector<8x32xf32>
    %497 = arith.mulf %496, %496 : vector<8x32xf32>
    %cst_83 = arith.constant dense<0.000000e+00> : vector<8xf32>
    %498 = vector.multi_reduction <add>, %497, %cst_83 [1] : vector<8x32xf32> to vector<8xf32>
    %499 = vector.shape_cast %498 : vector<8xf32> to vector<8x1xf32>
    %cst_84 = arith.constant 3.200000e+01 : f32
    %500 = vector.broadcast %cst_84 : f32 to vector<8x1xf32>
    %501 = arith.divf %499, %500 : vector<8x1xf32>
    %cst_85 = arith.constant 9.99999974E-6 : f32
    %502 = vector.broadcast %cst_85 : f32 to vector<8x1xf32>
    %503 = arith.addf %501, %502 : vector<8x1xf32>
    %504 = math.rsqrt %503 : vector<8x1xf32>
    %505 = vector.broadcast %504 : vector<8x1xf32> to vector<8x32xf32>
    %506 = arith.mulf %496, %505 : vector<8x32xf32>
    %507 = vector.broadcast %3 : vector<1x32xf32> to vector<8x32xf32>
    %508 = arith.mulf %506, %507 : vector<8x32xf32>
    %509 = vector.broadcast %5 : vector<1x32xf32> to vector<8x32xf32>
    %510 = arith.addf %508, %509 : vector<8x32xf32>
    %511 = tpu.concatenate %510, %457 in 1 : vector<8x32xf32>, vector<8x32xf32> -> vector<8x64xf32>
    %cst_86 = arith.constant dense<0.000000e+00> : vector<8x128xf32>
    %512 = tpu.matmul %511, %9, %cst_86 {dimension_numbers = #tpu.dot_dimension_numbers<[1], [0], [0], [1], [0, 0, 1, 1], [], []>} : vector<8x64xf32>, vector<64x128xf32>, vector<8x128xf32> -> vector<8x128xf32>
    %513 = vector.broadcast %11 : vector<1x128xf32> to vector<8x128xf32>
    %514 = arith.addf %512, %513 : vector<8x128xf32>
    %515 = vector.extract_strided_slice %514 {offsets = [0, 0], sizes = [8, 32], strides = [1, 1]} : vector<8x128xf32> to vector<8x32xf32>
    %516 = vector.extract_strided_slice %514 {offsets = [0, 32], sizes = [8, 32], strides = [1, 1]} : vector<8x128xf32> to vector<8x32xf32>
    %517 = vector.extract_strided_slice %514 {offsets = [0, 64], sizes = [8, 32], strides = [1, 1]} : vector<8x128xf32> to vector<8x32xf32>
    %518 = vector.extract_strided_slice %514 {offsets = [0, 96], sizes = [8, 32], strides = [1, 1]} : vector<8x128xf32> to vector<8x32xf32>
    %519 = arith.addf %516, %437 : vector<8x32xf32>
    %520 = arith.maximumf %519, %515 : vector<8x32xf32>
    %521 = arith.subf %515, %520 : vector<8x32xf32>
    %522 = math.exp %521 : vector<8x32xf32>
    %523 = arith.addf %516, %437 : vector<8x32xf32>
    %524 = arith.subf %523, %520 : vector<8x32xf32>
    %525 = math.exp %524 : vector<8x32xf32>
    %526 = arith.mulf %525, %446 : vector<8x32xf32>
    %527 = math.tanh %517 : vector<8x32xf32>
    %528 = arith.mulf %522, %527 : vector<8x32xf32>
    %529 = arith.addf %526, %528 : vector<8x32xf32>
    %530 = arith.mulf %525, %448 : vector<8x32xf32>
    %531 = arith.addf %530, %522 : vector<8x32xf32>
    %532 = arith.negf %518 : vector<8x32xf32>
    %533 = math.exp %532 : vector<8x32xf32>
    %cst_87 = arith.constant 1.000000e+00 : f32
    %534 = vector.broadcast %cst_87 : f32 to vector<8x32xf32>
    %535 = arith.addf %534, %533 : vector<8x32xf32>
    %536 = arith.divf %534, %535 : vector<8x32xf32>
    %537 = arith.mulf %536, %529 : vector<8x32xf32>
    %cst_88 = arith.constant 1.000000e+00 : f32
    %538 = vector.broadcast %cst_88 : f32 to vector<8x32xf32>
    %539 = arith.maximumf %531, %538 : vector<8x32xf32>
    %540 = arith.divf %537, %539 : vector<8x32xf32>
    %541 = vector.extract_strided_slice %40 {offsets = [6, 0, 0], sizes = [1, 8, 128], strides = [1, 1, 1]} : vector<8x8x128xf32> to vector<1x8x128xf32>
    %542 = vector.shape_cast %541 : vector<1x8x128xf32> to vector<8x128xf32>
    %cst_89 = arith.constant dense<0.000000e+00> : vector<8x128xf32>
    %543 = tpu.matmul %487, %8, %cst_89 {dimension_numbers = #tpu.dot_dimension_numbers<[1], [0], [0], [1], [0, 0, 1, 1], [], []>} : vector<8x32xf32>, vector<32x128xf32>, vector<8x128xf32> -> vector<8x128xf32>
    %544 = arith.addf %542, %543 : vector<8x128xf32>
    %545 = vector.extract_strided_slice %544 {offsets = [0, 0], sizes = [8, 32], strides = [1, 1]} : vector<8x128xf32> to vector<8x32xf32>
    %546 = vector.extract_strided_slice %544 {offsets = [0, 32], sizes = [8, 32], strides = [1, 1]} : vector<8x128xf32> to vector<8x32xf32>
    %547 = vector.extract_strided_slice %544 {offsets = [0, 64], sizes = [8, 32], strides = [1, 1]} : vector<8x128xf32> to vector<8x32xf32>
    %548 = vector.extract_strided_slice %544 {offsets = [0, 96], sizes = [8, 32], strides = [1, 1]} : vector<8x128xf32> to vector<8x32xf32>
    %549 = arith.addf %546, %467 : vector<8x32xf32>
    %550 = arith.maximumf %549, %545 : vector<8x32xf32>
    %551 = arith.subf %545, %550 : vector<8x32xf32>
    %552 = math.exp %551 : vector<8x32xf32>
    %553 = arith.addf %546, %467 : vector<8x32xf32>
    %554 = arith.subf %553, %550 : vector<8x32xf32>
    %555 = math.exp %554 : vector<8x32xf32>
    %556 = arith.mulf %555, %476 : vector<8x32xf32>
    %557 = math.tanh %547 : vector<8x32xf32>
    %558 = arith.mulf %552, %557 : vector<8x32xf32>
    %559 = arith.addf %556, %558 : vector<8x32xf32>
    %560 = arith.mulf %555, %478 : vector<8x32xf32>
    %561 = arith.addf %560, %552 : vector<8x32xf32>
    %562 = arith.negf %548 : vector<8x32xf32>
    %563 = math.exp %562 : vector<8x32xf32>
    %cst_90 = arith.constant 1.000000e+00 : f32
    %564 = vector.broadcast %cst_90 : f32 to vector<8x32xf32>
    %565 = arith.addf %564, %563 : vector<8x32xf32>
    %566 = arith.divf %564, %565 : vector<8x32xf32>
    %567 = arith.mulf %566, %559 : vector<8x32xf32>
    %cst_91 = arith.constant 1.000000e+00 : f32
    %568 = vector.broadcast %cst_91 : f32 to vector<8x32xf32>
    %569 = arith.maximumf %561, %568 : vector<8x32xf32>
    %570 = arith.divf %567, %569 : vector<8x32xf32>
    %571 = vector.extract_strided_slice %41 {offsets = [6, 0, 0], sizes = [1, 8, 32], strides = [1, 1, 1]} : vector<8x8x32xf32> to vector<1x8x32xf32>
    %572 = vector.shape_cast %571 : vector<1x8x32xf32> to vector<8x32xf32>
    %573 = arith.addf %572, %570 : vector<8x32xf32>
    %cst_92 = arith.constant dense<0.000000e+00> : vector<8xf32>
    %574 = vector.multi_reduction <add>, %573, %cst_92 [1] : vector<8x32xf32> to vector<8xf32>
    %575 = vector.shape_cast %574 : vector<8xf32> to vector<8x1xf32>
    %cst_93 = arith.constant 3.200000e+01 : f32
    %576 = vector.broadcast %cst_93 : f32 to vector<8x1xf32>
    %577 = arith.divf %575, %576 : vector<8x1xf32>
    %578 = vector.broadcast %577 : vector<8x1xf32> to vector<8x32xf32>
    %579 = arith.subf %573, %578 : vector<8x32xf32>
    %580 = arith.mulf %579, %579 : vector<8x32xf32>
    %cst_94 = arith.constant dense<0.000000e+00> : vector<8xf32>
    %581 = vector.multi_reduction <add>, %580, %cst_94 [1] : vector<8x32xf32> to vector<8xf32>
    %582 = vector.shape_cast %581 : vector<8xf32> to vector<8x1xf32>
    %cst_95 = arith.constant 3.200000e+01 : f32
    %583 = vector.broadcast %cst_95 : f32 to vector<8x1xf32>
    %584 = arith.divf %582, %583 : vector<8x1xf32>
    %cst_96 = arith.constant 9.99999974E-6 : f32
    %585 = vector.broadcast %cst_96 : f32 to vector<8x1xf32>
    %586 = arith.addf %584, %585 : vector<8x1xf32>
    %587 = math.rsqrt %586 : vector<8x1xf32>
    %588 = vector.broadcast %587 : vector<8x1xf32> to vector<8x32xf32>
    %589 = arith.mulf %579, %588 : vector<8x32xf32>
    %590 = vector.broadcast %3 : vector<1x32xf32> to vector<8x32xf32>
    %591 = arith.mulf %589, %590 : vector<8x32xf32>
    %592 = vector.broadcast %5 : vector<1x32xf32> to vector<8x32xf32>
    %593 = arith.addf %591, %592 : vector<8x32xf32>
    %594 = tpu.concatenate %593, %540 in 1 : vector<8x32xf32>, vector<8x32xf32> -> vector<8x64xf32>
    %cst_97 = arith.constant dense<0.000000e+00> : vector<8x128xf32>
    %595 = tpu.matmul %594, %9, %cst_97 {dimension_numbers = #tpu.dot_dimension_numbers<[1], [0], [0], [1], [0, 0, 1, 1], [], []>} : vector<8x64xf32>, vector<64x128xf32>, vector<8x128xf32> -> vector<8x128xf32>
    %596 = vector.broadcast %11 : vector<1x128xf32> to vector<8x128xf32>
    %597 = arith.addf %595, %596 : vector<8x128xf32>
    %598 = vector.extract_strided_slice %597 {offsets = [0, 0], sizes = [8, 32], strides = [1, 1]} : vector<8x128xf32> to vector<8x32xf32>
    %599 = vector.extract_strided_slice %597 {offsets = [0, 32], sizes = [8, 32], strides = [1, 1]} : vector<8x128xf32> to vector<8x32xf32>
    %600 = vector.extract_strided_slice %597 {offsets = [0, 64], sizes = [8, 32], strides = [1, 1]} : vector<8x128xf32> to vector<8x32xf32>
    %601 = vector.extract_strided_slice %597 {offsets = [0, 96], sizes = [8, 32], strides = [1, 1]} : vector<8x128xf32> to vector<8x32xf32>
    %602 = arith.addf %599, %520 : vector<8x32xf32>
    %603 = arith.maximumf %602, %598 : vector<8x32xf32>
    %604 = arith.subf %598, %603 : vector<8x32xf32>
    %605 = math.exp %604 : vector<8x32xf32>
    %606 = arith.addf %599, %520 : vector<8x32xf32>
    %607 = arith.subf %606, %603 : vector<8x32xf32>
    %608 = math.exp %607 : vector<8x32xf32>
    %609 = arith.mulf %608, %529 : vector<8x32xf32>
    %610 = math.tanh %600 : vector<8x32xf32>
    %611 = arith.mulf %605, %610 : vector<8x32xf32>
    %612 = arith.addf %609, %611 : vector<8x32xf32>
    %613 = arith.mulf %608, %531 : vector<8x32xf32>
    %614 = arith.addf %613, %605 : vector<8x32xf32>
    %615 = arith.negf %601 : vector<8x32xf32>
    %616 = math.exp %615 : vector<8x32xf32>
    %cst_98 = arith.constant 1.000000e+00 : f32
    %617 = vector.broadcast %cst_98 : f32 to vector<8x32xf32>
    %618 = arith.addf %617, %616 : vector<8x32xf32>
    %619 = arith.divf %617, %618 : vector<8x32xf32>
    %620 = arith.mulf %619, %612 : vector<8x32xf32>
    %cst_99 = arith.constant 1.000000e+00 : f32
    %621 = vector.broadcast %cst_99 : f32 to vector<8x32xf32>
    %622 = arith.maximumf %614, %621 : vector<8x32xf32>
    %623 = arith.divf %620, %622 : vector<8x32xf32>
    %624 = vector.extract_strided_slice %40 {offsets = [7, 0, 0], sizes = [1, 8, 128], strides = [1, 1, 1]} : vector<8x8x128xf32> to vector<1x8x128xf32>
    %625 = vector.shape_cast %624 : vector<1x8x128xf32> to vector<8x128xf32>
    %cst_100 = arith.constant dense<0.000000e+00> : vector<8x128xf32>
    %626 = tpu.matmul %570, %8, %cst_100 {dimension_numbers = #tpu.dot_dimension_numbers<[1], [0], [0], [1], [0, 0, 1, 1], [], []>} : vector<8x32xf32>, vector<32x128xf32>, vector<8x128xf32> -> vector<8x128xf32>
    %627 = arith.addf %625, %626 : vector<8x128xf32>
    %628 = vector.extract_strided_slice %627 {offsets = [0, 0], sizes = [8, 32], strides = [1, 1]} : vector<8x128xf32> to vector<8x32xf32>
    %629 = vector.extract_strided_slice %627 {offsets = [0, 32], sizes = [8, 32], strides = [1, 1]} : vector<8x128xf32> to vector<8x32xf32>
    %630 = vector.extract_strided_slice %627 {offsets = [0, 64], sizes = [8, 32], strides = [1, 1]} : vector<8x128xf32> to vector<8x32xf32>
    %631 = vector.extract_strided_slice %627 {offsets = [0, 96], sizes = [8, 32], strides = [1, 1]} : vector<8x128xf32> to vector<8x32xf32>
    %632 = arith.addf %629, %550 : vector<8x32xf32>
    %633 = arith.maximumf %632, %628 : vector<8x32xf32>
    %634 = arith.subf %628, %633 : vector<8x32xf32>
    %635 = math.exp %634 : vector<8x32xf32>
    %636 = arith.addf %629, %550 : vector<8x32xf32>
    %637 = arith.subf %636, %633 : vector<8x32xf32>
    %638 = math.exp %637 : vector<8x32xf32>
    %639 = arith.mulf %638, %559 : vector<8x32xf32>
    %640 = math.tanh %630 : vector<8x32xf32>
    %641 = arith.mulf %635, %640 : vector<8x32xf32>
    %642 = arith.addf %639, %641 : vector<8x32xf32>
    %643 = arith.mulf %638, %561 : vector<8x32xf32>
    %644 = arith.addf %643, %635 : vector<8x32xf32>
    %645 = arith.negf %631 : vector<8x32xf32>
    %646 = math.exp %645 : vector<8x32xf32>
    %cst_101 = arith.constant 1.000000e+00 : f32
    %647 = vector.broadcast %cst_101 : f32 to vector<8x32xf32>
    %648 = arith.addf %647, %646 : vector<8x32xf32>
    %649 = arith.divf %647, %648 : vector<8x32xf32>
    %650 = arith.mulf %649, %642 : vector<8x32xf32>
    %cst_102 = arith.constant 1.000000e+00 : f32
    %651 = vector.broadcast %cst_102 : f32 to vector<8x32xf32>
    %652 = arith.maximumf %644, %651 : vector<8x32xf32>
    %653 = arith.divf %650, %652 : vector<8x32xf32>
    %654 = vector.extract_strided_slice %41 {offsets = [7, 0, 0], sizes = [1, 8, 32], strides = [1, 1, 1]} : vector<8x8x32xf32> to vector<1x8x32xf32>
    %655 = vector.shape_cast %654 : vector<1x8x32xf32> to vector<8x32xf32>
    %656 = arith.addf %655, %653 : vector<8x32xf32>
    %cst_103 = arith.constant dense<0.000000e+00> : vector<8xf32>
    %657 = vector.multi_reduction <add>, %656, %cst_103 [1] : vector<8x32xf32> to vector<8xf32>
    %658 = vector.shape_cast %657 : vector<8xf32> to vector<8x1xf32>
    %cst_104 = arith.constant 3.200000e+01 : f32
    %659 = vector.broadcast %cst_104 : f32 to vector<8x1xf32>
    %660 = arith.divf %658, %659 : vector<8x1xf32>
    %661 = vector.broadcast %660 : vector<8x1xf32> to vector<8x32xf32>
    %662 = arith.subf %656, %661 : vector<8x32xf32>
    %663 = arith.mulf %662, %662 : vector<8x32xf32>
    %cst_105 = arith.constant dense<0.000000e+00> : vector<8xf32>
    %664 = vector.multi_reduction <add>, %663, %cst_105 [1] : vector<8x32xf32> to vector<8xf32>
    %665 = vector.shape_cast %664 : vector<8xf32> to vector<8x1xf32>
    %cst_106 = arith.constant 3.200000e+01 : f32
    %666 = vector.broadcast %cst_106 : f32 to vector<8x1xf32>
    %667 = arith.divf %665, %666 : vector<8x1xf32>
    %cst_107 = arith.constant 9.99999974E-6 : f32
    %668 = vector.broadcast %cst_107 : f32 to vector<8x1xf32>
    %669 = arith.addf %667, %668 : vector<8x1xf32>
    %670 = math.rsqrt %669 : vector<8x1xf32>
    %671 = vector.broadcast %670 : vector<8x1xf32> to vector<8x32xf32>
    %672 = arith.mulf %662, %671 : vector<8x32xf32>
    %673 = vector.broadcast %3 : vector<1x32xf32> to vector<8x32xf32>
    %674 = arith.mulf %672, %673 : vector<8x32xf32>
    %675 = vector.broadcast %5 : vector<1x32xf32> to vector<8x32xf32>
    %676 = arith.addf %674, %675 : vector<8x32xf32>
    %677 = tpu.concatenate %676, %623 in 1 : vector<8x32xf32>, vector<8x32xf32> -> vector<8x64xf32>
    %cst_108 = arith.constant dense<0.000000e+00> : vector<8x128xf32>
    %678 = tpu.matmul %677, %9, %cst_108 {dimension_numbers = #tpu.dot_dimension_numbers<[1], [0], [0], [1], [0, 0, 1, 1], [], []>} : vector<8x64xf32>, vector<64x128xf32>, vector<8x128xf32> -> vector<8x128xf32>
    %679 = vector.broadcast %11 : vector<1x128xf32> to vector<8x128xf32>
    %680 = arith.addf %678, %679 : vector<8x128xf32>
    %681 = vector.extract_strided_slice %680 {offsets = [0, 0], sizes = [8, 32], strides = [1, 1]} : vector<8x128xf32> to vector<8x32xf32>
    %682 = vector.extract_strided_slice %680 {offsets = [0, 32], sizes = [8, 32], strides = [1, 1]} : vector<8x128xf32> to vector<8x32xf32>
    %683 = vector.extract_strided_slice %680 {offsets = [0, 64], sizes = [8, 32], strides = [1, 1]} : vector<8x128xf32> to vector<8x32xf32>
    %684 = vector.extract_strided_slice %680 {offsets = [0, 96], sizes = [8, 32], strides = [1, 1]} : vector<8x128xf32> to vector<8x32xf32>
    %685 = arith.addf %682, %603 : vector<8x32xf32>
    %686 = arith.maximumf %685, %681 : vector<8x32xf32>
    %687 = arith.subf %681, %686 : vector<8x32xf32>
    %688 = math.exp %687 : vector<8x32xf32>
    %689 = arith.addf %682, %603 : vector<8x32xf32>
    %690 = arith.subf %689, %686 : vector<8x32xf32>
    %691 = math.exp %690 : vector<8x32xf32>
    %692 = arith.mulf %691, %612 : vector<8x32xf32>
    %693 = math.tanh %683 : vector<8x32xf32>
    %694 = arith.mulf %688, %693 : vector<8x32xf32>
    %695 = arith.addf %692, %694 : vector<8x32xf32>
    %696 = arith.mulf %691, %614 : vector<8x32xf32>
    %697 = arith.addf %696, %688 : vector<8x32xf32>
    %698 = arith.negf %684 : vector<8x32xf32>
    %699 = math.exp %698 : vector<8x32xf32>
    %cst_109 = arith.constant 1.000000e+00 : f32
    %700 = vector.broadcast %cst_109 : f32 to vector<8x32xf32>
    %701 = arith.addf %700, %699 : vector<8x32xf32>
    %702 = arith.divf %700, %701 : vector<8x32xf32>
    %703 = arith.mulf %702, %695 : vector<8x32xf32>
    %cst_110 = arith.constant 1.000000e+00 : f32
    %704 = vector.broadcast %cst_110 : f32 to vector<8x32xf32>
    %705 = arith.maximumf %697, %704 : vector<8x32xf32>
    %706 = arith.divf %703, %705 : vector<8x32xf32>
    %707 = arith.addf %656, %706 : vector<8x32xf32>
    %708 = vector.extract_strided_slice %707 {offsets = [0, 0], sizes = [2, 32], strides = [1, 1]} : vector<8x32xf32> to vector<2x32xf32>
    %709 = vector.broadcast %6 : vector<1x32xf32> to vector<2x32xf32>
    %710 = arith.mulf %708, %709 : vector<2x32xf32>
    %cst_111 = arith.constant dense<0.000000e+00> : vector<2xf32>
    %711 = vector.multi_reduction <add>, %710, %cst_111 [1] : vector<2x32xf32> to vector<2xf32>
    %712 = vector.shape_cast %711 : vector<2xf32> to vector<2x1xf32>
    %c0_112 = arith.constant 0 : index
    %713 = memref.load %arg3[%c0_112] : memref<1xf32, #tpu.memory_space<smem>>
    %714 = vector.broadcast %713 : f32 to vector<2x1xf32>
    %715 = arith.addf %712, %714 : vector<2x1xf32>
    %c0_113 = arith.constant 0 : index
    %c0_114 = arith.constant 0 : index
    %716 = vector.load %arg4[%c0_113, %c0_114] : memref<2x1xf32, #tpu.memory_space<vmem>>, vector<2x1xf32>
    tpu.vector_store %arg4[%c0_113, %c0_114], %715 {strides = array<i32>} : memref<2x1xf32, #tpu.memory_space<vmem>>, vector<2x1xf32>,
    return
  }
}

</mosaic_0001>

<llo_original>
// kernel: stock_model_forward.1
$region0: #{stock_model_forward.1}
  #allocation0 [shape = 'u32[]', space=smem, size = 0x4, offset = 0x4, fixed_abs, tag = 'smem constant byte address 0x4 - core index']
  #allocation1 [shape = 'u32[72,128]{1,0:T(1,128)}', space=vmem, size = 0x9000, scoped, tag = 'internal scratch']
  #allocation2 [shape = 'f32[1]{0:T(128)S(6)}', space=smem, size = 0x200, scoped, tag = 'scoped memory for stock_model_forward.1']
  %s0 = inlined_call_operand.vmem [shape: f32[8,8,7], index: 0, kind: input, shape index: {}]
  %s1 = inlined_call_operand.vmem [shape: f32[130,128], index: 1, kind: input, shape index: {}]
  %s2 = inlined_call_operand.vmem [shape: f32[13,32], index: 2, kind: input, shape index: {}]
  %s3 = inlined_call_operand.<no memory space> [shape: f32[1], index: 3, kind: input, shape index: {}]
  %s4 = inlined_call_operand.vmem [shape: f32[2,1], index: 4, kind: output, shape index: {}]
  %s5 = sld [smem:[#allocation0]]
  $region26: #{stock_model_forward.1} parent=0
    _
  %s7 = ssub.s32 1, %s5
  %s8 = scalar_select 0, %s7, %s5
  %9 = sst [smem:[#allocation2]] %s3
  // Predicated region
  $region2: #{stock_model_forward.1} parent=0 // pred_check
    _
  $region3: #{stock_model_forward.1} parent=0 // pred_check_branch
    %11 = sbr.rel (0) target = $region5
  $region4: #{stock_model_forward.1} parent=0 // pred_region
    _
  $region5: #{stock_model_forward.1} parent=0 // pred_fallthru
    _
  // Predicated region
  $region6: #{stock_model_forward.1} parent=0 // pred_check
    _
  $region7: #{stock_model_forward.1} parent=0 // pred_check_branch
    %13 = sbr.rel (0) target = $region9
  $region8: #{stock_model_forward.1} parent=0 // pred_region
    _
  $region9: #{stock_model_forward.1} parent=0 // pred_fallthru
    _
  // Predicated region
  $region10: #{stock_model_forward.1} parent=0 // pred_check
    _
  $region11: #{stock_model_forward.1} parent=0 // pred_check_branch
    %15 = sbr.rel (0) target = $region13
  $region12: #{stock_model_forward.1} parent=0 // pred_region
    _
  $region13: #{stock_model_forward.1} parent=0 // pred_fallthru
    _
  // Predicated region
  $region14: #{stock_model_forward.1} parent=0 // pred_check
    _
  $region15: #{stock_model_forward.1} parent=0 // pred_check_branch
    %17 = sbr.rel (0) target = $region17
  $region16: #{stock_model_forward.1} parent=0 // pred_region
    _
  $region17: #{stock_model_forward.1} parent=0 // pred_fallthru
    _
  %v18 = vld [vmem:[%s2] sm:$0x7f]
  %v19 = vld [vmem:[%s2 + $0x7] sm:$0x1]
  %v20 = vld [vmem:[%s2 + $0x8] sm:$0x1]
  %v21 = vld [vmem:[%s2 + $0x9] sm:$0x1]
  %v22 = vld [vmem:[%s2 + $0xa] sm:$0x1]
  %v23 = vld [vmem:[%s2 + $0xb] sm:$0x1]
  %v24 = vld [vmem:[%s2 + $0xc] sm:$0x1]
  %v25 = vld [vmem:[%s1] sm:$0xff]
  %v26 = vld [vmem:[%s1 + $0x8] sm:$0xff]
  %v27 = vld [vmem:[%s1 + $0x10] sm:$0xff]
  %v28 = vld [vmem:[%s1 + $0x18] sm:$0xff]
  %v29 = vld [vmem:[%s1 + $0x20] sm:$0xff]
  %v30 = vld [vmem:[%s1 + $0x28] sm:$0xff]
  %v31 = vld [vmem:[%s1 + $0x30] sm:$0xff]
  %v32 = vld [vmem:[%s1 + $0x38] sm:$0xff]
  %v33 = vld [vmem:[%s1 + $0x40] sm:$0xff]
  %v34 = vld [vmem:[%s1 + $0x48] sm:$0xff]
  %v35 = vld [vmem:[%s1 + $0x50] sm:$0xff]
  %v36 = vld [vmem:[%s1 + $0x58] sm:$0xff]
  %v37 = vld [vmem:[%s1 + $0x60] sm:$0xff]
  %v38 = vld [vmem:[%s1 + $0x68] sm:$0xff]
  %v39 = vld [vmem:[%s1 + $0x70] sm:$0xff]
  %v40 = vld [vmem:[%s1 + $0x78] sm:$0xff]
  %v41 = vld [vmem:[%s1 + $0x80] sm:$0x1]
  %v42 = vld [vmem:[%s1 + $0x81] sm:$0x1]
  %v43 = vld [vmem:[%s0] sm:$0xff]
  %v44 = vld [vmem:[%s0 + $0x8] sm:$0xff]
  %v45 = vld [vmem:[%s0 + $0x10] sm:$0xff]
  %v46 = vld [vmem:[%s0 + $0x18] sm:$0xff]
  %v47 = vld [vmem:[%s0 + $0x20] sm:$0xff]
  %v48 = vld [vmem:[%s0 + $0x28] sm:$0xff]
  %v49 = vld [vmem:[%s0 + $0x30] sm:$0xff]
  %v50 = vld [vmem:[%s0 + $0x38] sm:$0xff]
  %v51 = vperm.slane %v19, 0
  %vm52 = vcmask 56320
  %v54 = vsel %vm52, %v43, 0
  %v57 = vsel %vm52, %v44, 0
  %v60 = vsel %vm52, %v45, 0
  %v63 = vsel %vm52, %v46, 0
  %v66 = vsel %vm52, %v47, 0
  %v69 = vsel %vm52, %v48, 0
  %v72 = vsel %vm52, %v49, 0
  %v75 = vsel %vm52, %v50, 0
  %vm77 = vcmask 1046528
  %v79 = vsel %vm77, %v18, 0
  %81 = vmatpush.msra.mxu0 0.0
  %82 = vmatpush.msra.mxu0 0.0
  %83 = vmatpush.msra.mxu0 0.0
  %84 = vmatpush.msra.mxu0 0.0
  %85 = vmatpush.msra.mxu0 0.0
  %86 = vmatpush.msra.mxu0 0.0
  %87 = vmatpush.msra.mxu0 0.0
  %88 = vmatpush.msra.mxu0 0.0
  %89 = vmatpush.msra.mxu0 0.0
  %90 = vmatpush.msra.mxu0 0.0
  %91 = vmatpush.msra.mxu0 0.0
  %92 = vmatpush.msra.mxu0 0.0
  %93 = vmatpush.msra.mxu0 0.0
  %94 = vmatpush.msra.mxu0 0.0
  %95 = vmatpush.msra.mxu0 0.0
  %96 = vmatpush.msra.mxu0 %v79
  %97 = vmatmul.f32.gmra.mxu0 %v54
  %v98 = vpop.f32.mrf.mxu0
  %v99 = vadd.f32 %v51, %v98
  %100 = vmatmul.f32.gmra.mxu0 %v57
  %v101 = vpop.f32.mrf.mxu0
  %v102 = vadd.f32 %v51, %v101
  %103 = vmatmul.f32.gmra.mxu0 %v60
  %v104 = vpop.f32.mrf.mxu0
  %v105 = vadd.f32 %v51, %v104
  %106 = vmatmul.f32.gmra.mxu0 %v63
  %v107 = vpop.f32.mrf.mxu0
  %v108 = vadd.f32 %v51, %v107
  %109 = vmatmul.f32.gmra.mxu0 %v66
  %v110 = vpop.f32.mrf.mxu0
  %v111 = vadd.f32 %v51, %v110
  %112 = vmatmul.f32.gmra.mxu0 %v69
  %v113 = vpop.f32.mrf.mxu0
  %v114 = vadd.f32 %v51, %v113
  %115 = vmatmul.f32.gmra.mxu0 %v72
  %v116 = vpop.f32.mrf.mxu0
  %v117 = vadd.f32 %v51, %v116
  %118 = vmatmul.f32.gmra.mxu0 %v75
  %v119 = vpop.f32.mrf.mxu0
  %v120 = vadd.f32 %v51, %v119
  %121 = vdwg.mxu0
  %vm122 = vcmask 261120
  %v123 = vsel %vm122, %v99, 0.0
  %124 = vadd.xlane.f32.xlu0 %v123
  %v125 = vpop.xlane.xlu0 %124
  %v126 = vsel %vm122, %v102, 0.0
  %127 = vadd.xlane.f32.xlu0 %v126
  %v128 = vpop.xlane.xlu0 %127
  %v129 = vsel %vm122, %v105, 0.0
  %130 = vadd.xlane.f32.xlu0 %v129
  %v131 = vpop.xlane.xlu0 %130
  %v132 = vsel %vm122, %v108, 0.0
  %133 = vadd.xlane.f32.xlu0 %v132
  %v134 = vpop.xlane.xlu0 %133
  %v135 = vsel %vm122, %v111, 0.0
  %136 = vadd.xlane.f32.xlu0 %v135
  %v137 = vpop.xlane.xlu0 %136
  %v138 = vsel %vm122, %v114, 0.0
  %139 = vadd.xlane.f32.xlu0 %v138
  %v140 = vpop.xlane.xlu0 %139
  %v141 = vsel %vm122, %v117, 0.0
  %142 = vadd.xlane.f32.xlu0 %v141
  %v143 = vpop.xlane.xlu0 %142
  %v144 = vsel %vm122, %v120, 0.0
  %145 = vadd.xlane.f32.xlu0 %v144
  %v146 = vpop.xlane.xlu0 %145
  %v147 = vrcp.pop 32.0
  %v148 = vmul.f32 32.0, %v147
  %v149 = vsub.f32 1.0, %v148
  %v150 = vmul.f32 %v147, %v149
  %v151 = vadd.f32 %v147, %v150
  %vm152 = vweird.f32 %v147
  %v153 = vsel %vm152, %v147, %v151
  %v154 = vmul.f32 %v125, %v153
  %v155 = vmul.f32 %v128, %v153
  %v156 = vmul.f32 %v131, %v153
  %v157 = vmul.f32 %v134, %v153
  %v158 = vmul.f32 %v137, %v153
  %v159 = vmul.f32 %v140, %v153
  %v160 = vmul.f32 %v143, %v153
  %v161 = vmul.f32 %v146, %v153
  %v162 = vsub.f32 %v99, %v154
  %v163 = vsub.f32 %v102, %v155
  %v164 = vsub.f32 %v105, %v156
  %v165 = vsub.f32 %v108, %v157
  %v166 = vsub.f32 %v111, %v158
  %v167 = vsub.f32 %v114, %v159
  %v168 = vsub.f32 %v117, %v160
  %v169 = vsub.f32 %v120, %v161
  %v170 = vmul.f32 %v162, %v162
  %v171 = vmul.f32 %v163, %v163
  %v172 = vmul.f32 %v164, %v164
  %v173 = vmul.f32 %v165, %v165
  %v174 = vmul.f32 %v166, %v166
  %v175 = vmul.f32 %v167, %v167
  %v176 = vmul.f32 %v168, %v168
  %v177 = vmul.f32 %v169, %v169
  %v178 = vsel %vm122, %v170, 0.0
  %179 = vadd.xlane.f32.xlu0 %v178
  %v180 = vpop.xlane.xlu0 %179
  %v181 = vsel %vm122, %v171, 0.0
  %182 = vadd.xlane.f32.xlu0 %v181
  %v183 = vpop.xlane.xlu0 %182
  %v184 = vsel %vm122, %v172, 0.0
  %185 = vadd.xlane.f32.xlu0 %v184
  %v186 = vpop.xlane.xlu0 %185
  %v187 = vsel %vm122, %v173, 0.0
  %188 = vadd.xlane.f32.xlu0 %v187
  %v189 = vpop.xlane.xlu0 %188
  %v190 = vsel %vm122, %v174, 0.0
  %191 = vadd.xlane.f32.xlu0 %v190
  %v192 = vpop.xlane.xlu0 %191
  %v193 = vsel %vm122, %v175, 0.0
  %194 = vadd.xlane.f32.xlu0 %v193
  %v195 = vpop.xlane.xlu0 %194
  %v196 = vsel %vm122, %v176, 0.0
  %197 = vadd.xlane.f32.xlu0 %v196
  %v198 = vpop.xlane.xlu0 %197
  %v199 = vsel %vm122, %v177, 0.0
  %200 = vadd.xlane.f32.xlu0 %v199
  %v201 = vpop.xlane.xlu0 %200
  %v202 = vmul.f32 %v180, %v153
  %v203 = vmul.f32 %v183, %v153
  %v204 = vmul.f32 %v186, %v153
  %v205 = vmul.f32 %v189, %v153
  %v206 = vmul.f32 %v192, %v153
  %v207 = vmul.f32 %v195, %v153
  %v208 = vmul.f32 %v198, %v153
  %v209 = vmul.f32 %v201, %v153
  %v210 = vadd.f32 %v202, 1e-05
  %v211 = vadd.f32 %v203, 1e-05
  %v212 = vadd.f32 %v204, 1e-05
  %v213 = vadd.f32 %v205, 1e-05
  %v214 = vadd.f32 %v206, 1e-05
  %v215 = vadd.f32 %v207, 1e-05
  %v216 = vadd.f32 %v208, 1e-05
  %v217 = vadd.f32 %v209, 1e-05
  %v218 = vrsqrt.pop %v210
  %v219 = vmul.f32 %v218, %v210
  %v220 = vmul.f32 %v219, %v218
  %v221 = vmul.f32 0.5, %v220
  %v222 = vsub.f32 1.5, %v221
  %v223 = vmul.f32 %v218, %v222
  %vm224 = vweird.f32 %v210
  %vm225 = vweird.f32 %v218
  %vm226 = vmor %vm224, %vm225
  %v227 = vsel %vm226, %v218, %v223
  %v228 = vrsqrt.pop %v211
  %v229 = vmul.f32 %v228, %v211
  %v230 = vmul.f32 %v229, %v228
  %v231 = vmul.f32 0.5, %v230
  %v232 = vsub.f32 1.5, %v231
  %v233 = vmul.f32 %v228, %v232
  %vm234 = vweird.f32 %v211
  %vm235 = vweird.f32 %v228
  %vm236 = vmor %vm234, %vm235
  %v237 = vsel %vm236, %v228, %v233
  %v238 = vrsqrt.pop %v212
  %v239 = vmul.f32 %v238, %v212
  %v240 = vmul.f32 %v239, %v238
  %v241 = vmul.f32 0.5, %v240
  %v242 = vsub.f32 1.5, %v241
  %v243 = vmul.f32 %v238, %v242
  %vm244 = vweird.f32 %v212
  %vm245 = vweird.f32 %v238
  %vm246 = vmor %vm244, %vm245
  %v247 = vsel %vm246, %v238, %v243
  %v248 = vrsqrt.pop %v213
  %v249 = vmul.f32 %v248, %v213
  %v250 = vmul.f32 %v249, %v248
  %v251 = vmul.f32 0.5, %v250
  %v252 = vsub.f32 1.5, %v251
  %v253 = vmul.f32 %v248, %v252
  %vm254 = vweird.f32 %v213
  %vm255 = vweird.f32 %v248
  %vm256 = vmor %vm254, %vm255
  %v257 = vsel %vm256, %v248, %v253
  %v258 = vrsqrt.pop %v214
  %v259 = vmul.f32 %v258, %v214
  %v260 = vmul.f32 %v259, %v258
  %v261 = vmul.f32 0.5, %v260
  %v262 = vsub.f32 1.5, %v261
  %v263 = vmul.f32 %v258, %v262
  %vm264 = vweird.f32 %v214
  %vm265 = vweird.f32 %v258
  %vm266 = vmor %vm264, %vm265
  %v267 = vsel %vm266, %v258, %v263
  %v268 = vrsqrt.pop %v215
  %v269 = vmul.f32 %v268, %v215
  %v270 = vmul.f32 %v269, %v268
  %v271 = vmul.f32 0.5, %v270
  %v272 = vsub.f32 1.5, %v271
  %v273 = vmul.f32 %v268, %v272
  %vm274 = vweird.f32 %v215
  %vm275 = vweird.f32 %v268
  %vm276 = vmor %vm274, %vm275
  %v277 = vsel %vm276, %v268, %v273
  %v278 = vrsqrt.pop %v216
  %v279 = vmul.f32 %v278, %v216
  %v280 = vmul.f32 %v279, %v278
  %v281 = vmul.f32 0.5, %v280
  %v282 = vsub.f32 1.5, %v281
  %v283 = vmul.f32 %v278, %v282
  %vm284 = vweird.f32 %v216
  %vm285 = vweird.f32 %v278
  %vm286 = vmor %vm284, %vm285
  %v287 = vsel %vm286, %v278, %v283
  %v288 = vrsqrt.pop %v217
  %v289 = vmul.f32 %v288, %v217
  %v290 = vmul.f32 %v289, %v288
  %v291 = vmul.f32 0.5, %v290
  %v292 = vsub.f32 1.5, %v291
  %v293 = vmul.f32 %v288, %v292
  %vm294 = vweird.f32 %v217
  %vm295 = vweird.f32 %v288
  %vm296 = vmor %vm294, %vm295
  %v297 = vsel %vm296, %v288, %v293
  %v298 = vmul.f32 %v162, %v227
  %v299 = vmul.f32 %v163, %v237
  %v300 = vmul.f32 %v164, %v247
  %v301 = vmul.f32 %v165, %v257
  %v302 = vmul.f32 %v166, %v267
  %v303 = vmul.f32 %v167, %v277
  %v304 = vmul.f32 %v168, %v287
  %v305 = vmul.f32 %v169, %v297
  %v306 = vperm.slane %v20, 0
  %v307 = vmul.f32 %v298, %v306
  %v308 = vmul.f32 %v299, %v306
  %v309 = vmul.f32 %v300, %v306
  %v310 = vmul.f32 %v301, %v306
  %v311 = vmul.f32 %v302, %v306
  %v312 = vmul.f32 %v303, %v306
  %v313 = vmul.f32 %v304, %v306
  %v314 = vmul.f32 %v305, %v306
  %v315 = vperm.slane %v22, 0
  %v316 = vadd.f32 %v307, %v315
  %v317 = vadd.f32 %v308, %v315
  %v318 = vadd.f32 %v309, %v315
  %v319 = vadd.f32 %v310, %v315
  %v320 = vadd.f32 %v311, %v315
  %v321 = vadd.f32 %v312, %v315
  %v322 = vadd.f32 %v313, %v315
  %v323 = vadd.f32 %v314, %v315
  %v324 = vperm.slane %v41, 0
  %v326 = vsel %vm122, %v316, 0
  %v329 = vsel %vm122, %v317, 0
  %v332 = vsel %vm122, %v318, 0
  %v335 = vsel %vm122, %v319, 0
  %v338 = vsel %vm122, %v320, 0
  %v341 = vsel %vm122, %v321, 0
  %v344 = vsel %vm122, %v322, 0
  %v347 = vsel %vm122, %v323, 0
  %349 = vmatpush.msra.mxu0 0.0
  %350 = vmatpush.msra.mxu0 0.0
  %351 = vmatpush.msra.mxu0 0.0
  %352 = vmatpush.msra.mxu0 0.0
  %353 = vmatpush.msra.mxu0 0.0
  %354 = vmatpush.msra.mxu0 0.0
  %355 = vmatpush.msra.mxu0 0.0
  %356 = vmatpush.msra.mxu0 0.0
  %357 = vmatpush.msra.mxu0 0.0
  %358 = vmatpush.msra.mxu0 0.0
  %359 = vmatpush.msra.mxu0 0.0
  %360 = vmatpush.msra.mxu0 0.0
  %361 = vmatpush.msra.mxu0 %v28
  %362 = vmatpush.msra.mxu0 %v27
  %363 = vmatpush.msra.mxu0 %v26
  %364 = vmatpush.msra.mxu0 %v25
  %365 = vmatmul.f32.gmra.mxu0 %v326
  %v366 = vpop.f32.mrf.mxu0
  %v367 = vadd.f32 %v324, %v366
  %368 = vmatmul.f32.gmra.mxu0 %v329
  %v369 = vpop.f32.mrf.mxu0
  %v370 = vadd.f32 %v324, %v369
  %371 = vmatmul.f32.gmra.mxu0 %v332
  %v372 = vpop.f32.mrf.mxu0
  %v373 = vadd.f32 %v324, %v372
  %374 = vmatmul.f32.gmra.mxu0 %v335
  %v375 = vpop.f32.mrf.mxu0
  %v376 = vadd.f32 %v324, %v375
  %377 = vmatmul.f32.gmra.mxu0 %v338
  %v378 = vpop.f32.mrf.mxu0
  %v379 = vadd.f32 %v324, %v378
  %380 = vmatmul.f32.gmra.mxu0 %v341
  %v381 = vpop.f32.mrf.mxu0
  %v382 = vadd.f32 %v324, %v381
  %383 = vmatmul.f32.gmra.mxu0 %v344
  %v384 = vpop.f32.mrf.mxu0
  %v385 = vadd.f32 %v324, %v384
  %386 = vmatmul.f32.gmra.mxu0 %v347
  %v387 = vpop.f32.mrf.mxu0
  %v388 = vadd.f32 %v324, %v387
  %389 = vdwg.mxu0
  %v391 = vsel %vm122, 0.0, 0
  %393 = vmatpush.msra.mxu0 0.0
  %394 = vmatpush.msra.mxu0 0.0
  %395 = vmatpush.msra.mxu0 0.0
  %396 = vmatpush.msra.mxu0 0.0
  %397 = vmatpush.msra.mxu0 0.0
  %398 = vmatpush.msra.mxu0 0.0
  %399 = vmatpush.msra.mxu0 0.0
  %400 = vmatpush.msra.mxu0 0.0
  %401 = vmatpush.msra.mxu0 0.0
  %402 = vmatpush.msra.mxu0 0.0
  %403 = vmatpush.msra.mxu0 0.0
  %404 = vmatpush.msra.mxu0 0.0
  %405 = vmatpush.msra.mxu0 %v32
  %406 = vmatpush.msra.mxu0 %v31
  %407 = vmatpush.msra.mxu0 %v30
  %408 = vmatpush.msra.mxu0 %v29
  %409 = vmatmul.f32.gmra.mxu0 %v391
  %v410 = vpop.f32.mrf.mxu0
  %v411 = vadd.f32 0.0, %v410
  %412 = vdwg.mxu0
  %v413 = vadd.f32 %v367, %v411
  %v414 = vadd.f32 %v413, 0.0
  %416 = vrot.lane.b32.xlu0 %v413, 32
  %v417 = vpop.permute.xlu0 %416
  %v419 = vmax.f32 %v414, %v417
  %421 = vrot.lane.b32.xlu0 %v419, 96
  %v422 = vpop.permute.xlu0 %421
  %v424 = vsub.f32 %v413, %v422
  %v425 = vmul.f32 %v424, 1.442695
  %v426 = vpow.pop %v425
  %v427 = vsub.f32 %v414, %v419
  %v428 = vmul.f32 %v427, 1.442695
  %v429 = vpow.pop %v428
  %v430 = vmul.f32 %v429, 0.0
  %v431 = vtanh.pop %v413
  %433 = vrot.lane.b32.xlu0 %v431, 64
  %v434 = vpop.permute.xlu0 %433
  %v436 = vmul.f32 %v426, %v434
  %438 = vrot.lane.b32.xlu0 %v436, 32
  %v439 = vpop.permute.xlu0 %438
  %v441 = vadd.f32 %v430, %v439
  %443 = vrot.lane.b32.xlu0 %v426, 32
  %v444 = vpop.permute.xlu0 %443
  %v446 = vadd.f32 %v430, %v444
  %v447 = vxor.u32 %v413, 2147483648
  %v448 = vmul.f32 %v447, 1.442695
  %v449 = vpow.pop %v448
  %v450 = vadd.f32 %v449, 1.0
  %v451 = vrcp.pop %v450
  %v452 = vmul.f32 %v450, %v451
  %v453 = vsub.f32 1.0, %v452
  %v454 = vmul.f32 %v451, %v453
  %v455 = vadd.f32 %v451, %v454
  %vm456 = vweird.f32 %v450
  %vm457 = vweird.f32 %v451
  %vm458 = vmor %vm456, %vm457
  %v459 = vsel %vm458, %v451, %v455
  %v460 = vand.u32 2147483647, %v450
  %vm461 = vcmp.eq.f32.partialorder %v460, 8.507059e+37
  %v462 = vand.u32 %v450, 2147483648
  %v463 = vor.u32 1.1754944e-38, %v462
  %v464 = vsel %vm461, %v463, %v459
  %v465 = vmul.f32 1.0, %v464
  %467 = vrot.lane.b32.xlu0 %v441, 64
  %v468 = vpop.permute.xlu0 %467
  %v470 = vmul.f32 %v465, %v468
  %v471 = vmax.f32 %v446, 1.0
  %473 = vrot.lane.b32.xlu0 %v471, 64
  %v474 = vpop.permute.xlu0 %473
  %v476 = vrcp.pop %v474
  %v477 = vmul.f32 %v474, %v476
  %v478 = vsub.f32 1.0, %v477
  %v479 = vmul.f32 %v476, %v478
  %v480 = vadd.f32 %v476, %v479
  %vm481 = vweird.f32 %v474
  %vm482 = vweird.f32 %v476
  %vm483 = vmor %vm481, %vm482
  %v484 = vsel %vm483, %v476, %v480
  %v485 = vand.u32 2147483647, %v474
  %vm486 = vcmp.eq.f32.partialorder %v485, 8.507059e+37
  %v487 = vand.u32 %v474, 2147483648
  %v488 = vor.u32 1.1754944e-38, %v487
  %v489 = vsel %vm486, %v488, %v484
  %v490 = vmul.f32 %v470, %v489
  %492 = vrot.lane.b32.xlu0 %v490, 32
  %v493 = vpop.permute.xlu0 %492
  %v495 = vadd.f32 %v99, %v493
  %v496 = vsel %vm122, %v495, 0.0
  %497 = vadd.xlane.f32.xlu0 %v496
  %v498 = vpop.xlane.xlu0 %497
  %v499 = vmul.f32 %v498, %v153
  %v500 = vsub.f32 %v495, %v499
  %v501 = vmul.f32 %v500, %v500
  %v502 = vsel %vm122, %v501, 0.0
  %503 = vadd.xlane.f32.xlu0 %v502
  %v504 = vpop.xlane.xlu0 %503
  %v505 = vmul.f32 %v504, %v153
  %v506 = vadd.f32 %v505, 1e-05
  %v507 = vrsqrt.pop %v506
  %v508 = vmul.f32 %v507, %v506
  %v509 = vmul.f32 %v508, %v507
  %v510 = vmul.f32 0.5, %v509
  %v511 = vsub.f32 1.5, %v510
  %v512 = vmul.f32 %v507, %v511
  %vm513 = vweird.f32 %v506
  %vm514 = vweird.f32 %v507
  %vm515 = vmor %vm513, %vm514
  %v516 = vsel %vm515, %v507, %v512
  %v517 = vmul.f32 %v500, %v516
  %v518 = vperm.slane %v21, 0
  %v519 = vmul.f32 %v517, %v518
  %v520 = vperm.slane %v23, 0
  %v521 = vadd.f32 %v519, %v520
  %v522 = vsel %vm122, %v521, 0.0
  %v523 = vperm.slane %v42, 0
  %vm524 = vcmask 523264
  %v526 = vsel %vm524, %v522, 0
  %528 = vmatpush.msra.mxu0 0.0
  %529 = vmatpush.msra.mxu0 0.0
  %530 = vmatpush.msra.mxu0 0.0
  %531 = vmatpush.msra.mxu0 0.0
  %532 = vmatpush.msra.mxu0 0.0
  %533 = vmatpush.msra.mxu0 0.0
  %534 = vmatpush.msra.mxu0 0.0
  %535 = vmatpush.msra.mxu0 0.0
  %536 = vmatpush.msra.mxu0 %v40
  %537 = vmatpush.msra.mxu0 %v39
  %538 = vmatpush.msra.mxu0 %v38
  %539 = vmatpush.msra.mxu0 %v37
  %540 = vmatpush.msra.mxu0 %v36
  %541 = vmatpush.msra.mxu0 %v35
  %542 = vmatpush.msra.mxu0 %v34
  %543 = vmatpush.msra.mxu0 %v33
  %544 = vmatmul.f32.gmra.mxu0 %v526
  %v545 = vpop.f32.mrf.mxu0
  %v546 = vadd.f32 %v523, %v545
  %547 = vdwg.mxu0
  %v548 = vadd.f32 %v546, 0.0
  %550 = vrot.lane.b32.xlu0 %v546, 32
  %v551 = vpop.permute.xlu0 %550
  %v553 = vmax.f32 %v548, %v551
  %555 = vrot.lane.b32.xlu0 %v553, 96
  %v556 = vpop.permute.xlu0 %555
  %v558 = vsub.f32 %v546, %v556
  %v559 = vmul.f32 %v558, 1.442695
  %v560 = vpow.pop %v559
  %v561 = vsub.f32 %v548, %v553
  %v562 = vmul.f32 %v561, 1.442695
  %v563 = vpow.pop %v562
  %v564 = vmul.f32 %v563, 0.0
  %v565 = vtanh.pop %v546
  %567 = vrot.lane.b32.xlu0 %v565, 64
  %v568 = vpop.permute.xlu0 %567
  %v570 = vmul.f32 %v560, %v568
  %572 = vrot.lane.b32.xlu0 %v570, 32
  %v573 = vpop.permute.xlu0 %572
  %v575 = vadd.f32 %v564, %v573
  %577 = vrot.lane.b32.xlu0 %v560, 32
  %v578 = vpop.permute.xlu0 %577
  %v580 = vadd.f32 %v564, %v578
  %v581 = vxor.u32 %v546, 2147483648
  %v582 = vmul.f32 %v581, 1.442695
  %v583 = vpow.pop %v582
  %v584 = vadd.f32 %v583, 1.0
  %v585 = vrcp.pop %v584
  %v586 = vmul.f32 %v584, %v585
  %v587 = vsub.f32 1.0, %v586
  %v588 = vmul.f32 %v585, %v587
  %v589 = vadd.f32 %v585, %v588
  %vm590 = vweird.f32 %v584
  %vm591 = vweird.f32 %v585
  %vm592 = vmor %vm590, %vm591
  %v593 = vsel %vm592, %v585, %v589
  %v594 = vand.u32 2147483647, %v584
  %vm595 = vcmp.eq.f32.partialorder %v594, 8.507059e+37
  %v596 = vand.u32 %v584, 2147483648
  %v597 = vor.u32 1.1754944e-38, %v596
  %v598 = vsel %vm595, %v597, %v593
  %v599 = vmul.f32 1.0, %v598
  %601 = vrot.lane.b32.xlu0 %v575, 64
  %v602 = vpop.permute.xlu0 %601
  %v604 = vmul.f32 %v599, %v602
  %v605 = vmax.f32 %v580, 1.0
  %607 = vrot.lane.b32.xlu0 %v605, 64
  %v608 = vpop.permute.xlu0 %607
  %v610 = vrcp.pop %v608
  %v611 = vmul.f32 %v608, %v610
  %v612 = vsub.f32 1.0, %v611
  %v613 = vmul.f32 %v610, %v612
  %v614 = vadd.f32 %v610, %v613
  %vm615 = vweird.f32 %v608
  %vm616 = vweird.f32 %v610
  %vm617 = vmor %vm615, %vm616
  %v618 = vsel %vm617, %v610, %v614
  %v619 = vand.u32 2147483647, %v608
  %vm620 = vcmp.eq.f32.partialorder %v619, 8.507059e+37
  %v621 = vand.u32 %v608, 2147483648
  %v622 = vor.u32 1.1754944e-38, %v621
  %v623 = vsel %vm620, %v622, %v618
  %v624 = vmul.f32 %v604, %v623
  %v625 = vsel %vm122, %v493, 0
  %627 = vmatpush.msra.mxu0 0.0
  %628 = vmatpush.msra.mxu0 0.0
  %629 = vmatpush.msra.mxu0 0.0
  %630 = vmatpush.msra.mxu0 0.0
  %631 = vmatpush.msra.mxu0 0.0
  %632 = vmatpush.msra.mxu0 0.0
  %633 = vmatpush.msra.mxu0 0.0
  %634 = vmatpush.msra.mxu0 0.0
  %635 = vmatpush.msra.mxu0 0.0
  %636 = vmatpush.msra.mxu0 0.0
  %637 = vmatpush.msra.mxu0 0.0
  %638 = vmatpush.msra.mxu0 0.0
  %639 = vmatpush.msra.mxu0 %v32
  %640 = vmatpush.msra.mxu0 %v31
  %641 = vmatpush.msra.mxu0 %v30
  %642 = vmatpush.msra.mxu0 %v29
  %643 = vmatmul.f32.gmra.mxu0 %v625
  %v644 = vpop.f32.mrf.mxu0
  %v645 = vadd.f32 0.0, %v644
  %646 = vdwg.mxu0
  %v647 = vadd.f32 %v370, %v645
  %v648 = vadd.f32 %v647, %v419
  %650 = vrot.lane.b32.xlu0 %v647, 32
  %v651 = vpop.permute.xlu0 %650
  %v653 = vmax.f32 %v648, %v651
  %655 = vrot.lane.b32.xlu0 %v653, 96
  %v656 = vpop.permute.xlu0 %655
  %v658 = vsub.f32 %v647, %v656
  %v659 = vmul.f32 %v658, 1.442695
  %v660 = vpow.pop %v659
  %v661 = vsub.f32 %v648, %v653
  %v662 = vmul.f32 %v661, 1.442695
  %v663 = vpow.pop %v662
  %v664 = vmul.f32 %v663, %v441
  %v665 = vtanh.pop %v647
  %667 = vrot.lane.b32.xlu0 %v665, 64
  %v668 = vpop.permute.xlu0 %667
  %v670 = vmul.f32 %v660, %v668
  %672 = vrot.lane.b32.xlu0 %v670, 32
  %v673 = vpop.permute.xlu0 %672
  %v675 = vadd.f32 %v664, %v673
  %v676 = vmul.f32 %v663, %v446
  %678 = vrot.lane.b32.xlu0 %v660, 32
  %v679 = vpop.permute.xlu0 %678
  %v681 = vadd.f32 %v676, %v679
  %v682 = vxor.u32 %v647, 2147483648
  %v683 = vmul.f32 %v682, 1.442695
  %v684 = vpow.pop %v683
  %v685 = vadd.f32 %v684, 1.0
  %v686 = vrcp.pop %v685
  %v687 = vmul.f32 %v685, %v686
  %v688 = vsub.f32 1.0, %v687
  %v689 = vmul.f32 %v686, %v688
  %v690 = vadd.f32 %v686, %v689
  %vm691 = vweird.f32 %v685
  %vm692 = vweird.f32 %v686
  %vm693 = vmor %vm691, %vm692
  %v694 = vsel %vm693, %v686, %v690
  %v695 = vand.u32 2147483647, %v685
  %vm696 = vcmp.eq.f32.partialorder %v695, 8.507059e+37
  %v697 = vand.u32 %v685, 2147483648
  %v698 = vor.u32 1.1754944e-38, %v697
  %v699 = vsel %vm696, %v698, %v694
  %v700 = vmul.f32 1.0, %v699
  %702 = vrot.lane.b32.xlu0 %v675, 64
  %v703 = vpop.permute.xlu0 %702
  %v705 = vmul.f32 %v700, %v703
  %v706 = vmax.f32 %v681, 1.0
  %708 = vrot.lane.b32.xlu0 %v706, 64
  %v709 = vpop.permute.xlu0 %708
  %v711 = vrcp.pop %v709
  %v712 = vmul.f32 %v709, %v711
  %v713 = vsub.f32 1.0, %v712
  %v714 = vmul.f32 %v711, %v713
  %v715 = vadd.f32 %v711, %v714
  %vm716 = vweird.f32 %v709
  %vm717 = vweird.f32 %v711
  %vm718 = vmor %vm716, %vm717
  %v719 = vsel %vm718, %v711, %v715
  %v720 = vand.u32 2147483647, %v709
  %vm721 = vcmp.eq.f32.partialorder %v720, 8.507059e+37
  %v722 = vand.u32 %v709, 2147483648
  %v723 = vor.u32 1.1754944e-38, %v722
  %v724 = vsel %vm721, %v723, %v719
  %v725 = vmul.f32 %v705, %v724
  %727 = vrot.lane.b32.xlu0 %v725, 32
  %v728 = vpop.permute.xlu0 %727
  %v730 = vadd.f32 %v102, %v728
  %v731 = vsel %vm122, %v730, 0.0
  %732 = vadd.xlane.f32.xlu0 %v731
  %v733 = vpop.xlane.xlu0 %732
  %v734 = vmul.f32 %v733, %v153
  %v735 = vsub.f32 %v730, %v734
  %v736 = vmul.f32 %v735, %v735
  %v737 = vsel %vm122, %v736, 0.0
  %738 = vadd.xlane.f32.xlu0 %v737
  %v739 = vpop.xlane.xlu0 %738
  %v740 = vmul.f32 %v739, %v153
  %v741 = vadd.f32 %v740, 1e-05
  %v742 = vrsqrt.pop %v741
  %v743 = vmul.f32 %v742, %v741
  %v744 = vmul.f32 %v743, %v742
  %v745 = vmul.f32 0.5, %v744
  %v746 = vsub.f32 1.5, %v745
  %v747 = vmul.f32 %v742, %v746
  %vm748 = vweird.f32 %v741
  %vm749 = vweird.f32 %v742
  %vm750 = vmor %vm748, %vm749
  %v751 = vsel %vm750, %v742, %v747
  %v752 = vmul.f32 %v735, %v751
  %v753 = vmul.f32 %v752, %v518
  %v754 = vadd.f32 %v753, %v520
  %756 = vrot.lane.b32.xlu0 %v624, 64
  %v757 = vpop.permute.xlu0 %756
  %v759 = vsel %vm122, %v754, %v757
  %v761 = vsel %vm524, %v759, 0
  %763 = vmatpush.msra.mxu0 0.0
  %764 = vmatpush.msra.mxu0 0.0
  %765 = vmatpush.msra.mxu0 0.0
  %766 = vmatpush.msra.mxu0 0.0
  %767 = vmatpush.msra.mxu0 0.0
  %768 = vmatpush.msra.mxu0 0.0
  %769 = vmatpush.msra.mxu0 0.0
  %770 = vmatpush.msra.mxu0 0.0
  %771 = vmatpush.msra.mxu0 %v40
  %772 = vmatpush.msra.mxu0 %v39
  %773 = vmatpush.msra.mxu0 %v38
  %774 = vmatpush.msra.mxu0 %v37
  %775 = vmatpush.msra.mxu0 %v36
  %776 = vmatpush.msra.mxu0 %v35
  %777 = vmatpush.msra.mxu0 %v34
  %778 = vmatpush.msra.mxu0 %v33
  %779 = vmatmul.f32.gmra.mxu0 %v761
  %v780 = vpop.f32.mrf.mxu0
  %v781 = vadd.f32 %v523, %v780
  %782 = vdwg.mxu0
  %v783 = vadd.f32 %v781, %v553
  %785 = vrot.lane.b32.xlu0 %v781, 32
  %v786 = vpop.permute.xlu0 %785
  %v788 = vmax.f32 %v783, %v786
  %790 = vrot.lane.b32.xlu0 %v788, 96
  %v791 = vpop.permute.xlu0 %790
  %v793 = vsub.f32 %v781, %v791
  %v794 = vmul.f32 %v793, 1.442695
  %v795 = vpow.pop %v794
  %v796 = vsub.f32 %v783, %v788
  %v797 = vmul.f32 %v796, 1.442695
  %v798 = vpow.pop %v797
  %v799 = vmul.f32 %v798, %v575
  %v800 = vtanh.pop %v781
  %802 = vrot.lane.b32.xlu0 %v800, 64
  %v803 = vpop.permute.xlu0 %802
  %v805 = vmul.f32 %v795, %v803
  %807 = vrot.lane.b32.xlu0 %v805, 32
  %v808 = vpop.permute.xlu0 %807
  %v810 = vadd.f32 %v799, %v808
  %v811 = vmul.f32 %v798, %v580
  %813 = vrot.lane.b32.xlu0 %v795, 32
  %v814 = vpop.permute.xlu0 %813
  %v816 = vadd.f32 %v811, %v814
  %v817 = vxor.u32 %v781, 2147483648
  %v818 = vmul.f32 %v817, 1.442695
  %v819 = vpow.pop %v818
  %v820 = vadd.f32 %v819, 1.0
  %v821 = vrcp.pop %v820
  %v822 = vmul.f32 %v820, %v821
  %v823 = vsub.f32 1.0, %v822
  %v824 = vmul.f32 %v821, %v823
  %v825 = vadd.f32 %v821, %v824
  %vm826 = vweird.f32 %v820
  %vm827 = vweird.f32 %v821
  %vm828 = vmor %vm826, %vm827
  %v829 = vsel %vm828, %v821, %v825
  %v830 = vand.u32 2147483647, %v820
  %vm831 = vcmp.eq.f32.partialorder %v830, 8.507059e+37
  %v832 = vand.u32 %v820, 2147483648
  %v833 = vor.u32 1.1754944e-38, %v832
  %v834 = vsel %vm831, %v833, %v829
  %v835 = vmul.f32 1.0, %v834
  %837 = vrot.lane.b32.xlu0 %v810, 64
  %v838 = vpop.permute.xlu0 %837
  %v840 = vmul.f32 %v835, %v838
  %v841 = vmax.f32 %v816, 1.0
  %843 = vrot.lane.b32.xlu0 %v841, 64
  %v844 = vpop.permute.xlu0 %843
  %v846 = vrcp.pop %v844
  %v847 = vmul.f32 %v844, %v846
  %v848 = vsub.f32 1.0, %v847
  %v849 = vmul.f32 %v846, %v848
  %v850 = vadd.f32 %v846, %v849
  %vm851 = vweird.f32 %v844
  %vm852 = vweird.f32 %v846
  %vm853 = vmor %vm851, %vm852
  %v854 = vsel %vm853, %v846, %v850
  %v855 = vand.u32 2147483647, %v844
  %vm856 = vcmp.eq.f32.partialorder %v855, 8.507059e+37
  %v857 = vand.u32 %v844, 2147483648
  %v858 = vor.u32 1.1754944e-38, %v857
  %v859 = vsel %vm856, %v858, %v854
  %v860 = vmul.f32 %v840, %v859
  %v861 = vsel %vm122, %v728, 0
  %863 = vmatpush.msra.mxu0 0.0
  %864 = vmatpush.msra.mxu0 0.0
  %865 = vmatpush.msra.mxu0 0.0
  %866 = vmatpush.msra.mxu0 0.0
  %867 = vmatpush.msra.mxu0 0.0
  %868 = vmatpush.msra.mxu0 0.0
  %869 = vmatpush.msra.mxu0 0.0
  %870 = vmatpush.msra.mxu0 0.0
  %871 = vmatpush.msra.mxu0 0.0
  %872 = vmatpush.msra.mxu0 0.0
  %873 = vmatpush.msra.mxu0 0.0
  %874 = vmatpush.msra.mxu0 0.0
  %875 = vmatpush.msra.mxu0 %v32
  %876 = vmatpush.msra.mxu0 %v31
  %877 = vmatpush.msra.mxu0 %v30
  %878 = vmatpush.msra.mxu0 %v29
  %879 = vmatmul.f32.gmra.mxu0 %v861
  %v880 = vpop.f32.mrf.mxu0
  %v881 = vadd.f32 0.0, %v880
  %882 = vdwg.mxu0
  %v883 = vadd.f32 %v373, %v881
  %v884 = vadd.f32 %v883, %v653
  %886 = vrot.lane.b32.xlu0 %v883, 32
  %v887 = vpop.permute.xlu0 %886
  %v889 = vmax.f32 %v884, %v887
  %891 = vrot.lane.b32.xlu0 %v889, 96
  %v892 = vpop.permute.xlu0 %891
  %v894 = vsub.f32 %v883, %v892
  %v895 = vmul.f32 %v894, 1.442695
  %v896 = vpow.pop %v895
  %v897 = vsub.f32 %v884, %v889
  %v898 = vmul.f32 %v897, 1.442695
  %v899 = vpow.pop %v898
  %v900 = vmul.f32 %v899, %v675
  %v901 = vtanh.pop %v883
  %903 = vrot.lane.b32.xlu0 %v901, 64
  %v904 = vpop.permute.xlu0 %903
  %v906 = vmul.f32 %v896, %v904
  %908 = vrot.lane.b32.xlu0 %v906, 32
  %v909 = vpop.permute.xlu0 %908
  %v911 = vadd.f32 %v900, %v909
  %v912 = vmul.f32 %v899, %v681
  %914 = vrot.lane.b32.xlu0 %v896, 32
  %v915 = vpop.permute.xlu0 %914
  %v917 = vadd.f32 %v912, %v915
  %v918 = vxor.u32 %v883, 2147483648
  %v919 = vmul.f32 %v918, 1.442695
  %v920 = vpow.pop %v919
  %v921 = vadd.f32 %v920, 1.0
  %v922 = vrcp.pop %v921
  %v923 = vmul.f32 %v921, %v922
  %v924 = vsub.f32 1.0, %v923
  %v925 = vmul.f32 %v922, %v924
  %v926 = vadd.f32 %v922, %v925
  %vm927 = vweird.f32 %v921
  %vm928 = vweird.f32 %v922
  %vm929 = vmor %vm927, %vm928
  %v930 = vsel %vm929, %v922, %v926
  %v931 = vand.u32 2147483647, %v921
  %vm932 = vcmp.eq.f32.partialorder %v931, 8.507059e+37
  %v933 = vand.u32 %v921, 2147483648
  %v934 = vor.u32 1.1754944e-38, %v933
  %v935 = vsel %vm932, %v934, %v930
  %v936 = vmul.f32 1.0, %v935
  %938 = vrot.lane.b32.xlu0 %v911, 64
  %v939 = vpop.permute.xlu0 %938
  %v941 = vmul.f32 %v936, %v939
  %v942 = vmax.f32 %v917, 1.0
  %944 = vrot.lane.b32.xlu0 %v942, 64
  %v945 = vpop.permute.xlu0 %944
  %v947 = vrcp.pop %v945
  %v948 = vmul.f32 %v945, %v947
  %v949 = vsub.f32 1.0, %v948
  %v950 = vmul.f32 %v947, %v949
  %v951 = vadd.f32 %v947, %v950
  %vm952 = vweird.f32 %v945
  %vm953 = vweird.f32 %v947
  %vm954 = vmor %vm952, %vm953
  %v955 = vsel %vm954, %v947, %v951
  %v956 = vand.u32 2147483647, %v945
  %vm957 = vcmp.eq.f32.partialorder %v956, 8.507059e+37
  %v958 = vand.u32 %v945, 2147483648
  %v959 = vor.u32 1.1754944e-38, %v958
  %v960 = vsel %vm957, %v959, %v955
  %v961 = vmul.f32 %v941, %v960
  %963 = vrot.lane.b32.xlu0 %v961, 32
  %v964 = vpop.permute.xlu0 %963
  %v966 = vadd.f32 %v105, %v964
  %v967 = vsel %vm122, %v966, 0.0
  %968 = vadd.xlane.f32.xlu0 %v967
  %v969 = vpop.xlane.xlu0 %968
  %v970 = vmul.f32 %v969, %v153
  %v971 = vsub.f32 %v966, %v970
  %v972 = vmul.f32 %v971, %v971
  %v973 = vsel %vm122, %v972, 0.0
  %974 = vadd.xlane.f32.xlu0 %v973
  %v975 = vpop.xlane.xlu0 %974
  %v976 = vmul.f32 %v975, %v153
  %v977 = vadd.f32 %v976, 1e-05
  %v978 = vrsqrt.pop %v977
  %v979 = vmul.f32 %v978, %v977
  %v980 = vmul.f32 %v979, %v978
  %v981 = vmul.f32 0.5, %v980
  %v982 = vsub.f32 1.5, %v981
  %v983 = vmul.f32 %v978, %v982
  %vm984 = vweird.f32 %v977
  %vm985 = vweird.f32 %v978
  %vm986 = vmor %vm984, %vm985
  %v987 = vsel %vm986, %v978, %v983
  %v988 = vmul.f32 %v971, %v987
  %v989 = vmul.f32 %v988, %v518
  %v990 = vadd.f32 %v989, %v520
  %992 = vrot.lane.b32.xlu0 %v860, 64
  %v993 = vpop.permute.xlu0 %992
  %v995 = vsel %vm122, %v990, %v993
  %v997 = vsel %vm524, %v995, 0
  %999 = vmatpush.msra.mxu0 0.0
  %1000 = vmatpush.msra.mxu0 0.0
  %1001 = vmatpush.msra.mxu0 0.0
  %1002 = vmatpush.msra.mxu0 0.0
  %1003 = vmatpush.msra.mxu0 0.0
  %1004 = vmatpush.msra.mxu0 0.0
  %1005 = vmatpush.msra.mxu0 0.0
  %1006 = vmatpush.msra.mxu0 0.0
  %1007 = vmatpush.msra.mxu0 %v40
  %1008 = vmatpush.msra.mxu0 %v39
  %1009 = vmatpush.msra.mxu0 %v38
  %1010 = vmatpush.msra.mxu0 %v37
  %1011 = vmatpush.msra.mxu0 %v36
  %1012 = vmatpush.msra.mxu0 %v35
  %1013 = vmatpush.msra.mxu0 %v34
  %1014 = vmatpush.msra.mxu0 %v33
  %1015 = vmatmul.f32.gmra.mxu0 %v997
  %v1016 = vpop.f32.mrf.mxu0
  %v1017 = vadd.f32 %v523, %v1016
  %1018 = vdwg.mxu0
  %v1019 = vadd.f32 %v1017, %v788
  %1021 = vrot.lane.b32.xlu0 %v1017, 32
  %v1022 = vpop.permute.xlu0 %1021
  %v1024 = vmax.f32 %v1019, %v1022
  %1026 = vrot.lane.b32.xlu0 %v1024, 96
  %v1027 = vpop.permute.xlu0 %1026
  %v1029 = vsub.f32 %v1017, %v1027
  %v1030 = vmul.f32 %v1029, 1.442695
  %v1031 = vpow.pop %v1030
  %v1032 = vsub.f32 %v1019, %v1024
  %v1033 = vmul.f32 %v1032, 1.442695
  %v1034 = vpow.pop %v1033
  %v1035 = vmul.f32 %v1034, %v810
  %v1036 = vtanh.pop %v1017
  %1038 = vrot.lane.b32.xlu0 %v1036, 64
  %v1039 = vpop.permute.xlu0 %1038
  %v1041 = vmul.f32 %v1031, %v1039
  %1043 = vrot.lane.b32.xlu0 %v1041, 32
  %v1044 = vpop.permute.xlu0 %1043
  %v1046 = vadd.f32 %v1035, %v1044
  %v1047 = vmul.f32 %v1034, %v816
  %1049 = vrot.lane.b32.xlu0 %v1031, 32
  %v1050 = vpop.permute.xlu0 %1049
  %v1052 = vadd.f32 %v1047, %v1050
  %v1053 = vxor.u32 %v1017, 2147483648
  %v1054 = vmul.f32 %v1053, 1.442695
  %v1055 = vpow.pop %v1054
  %v1056 = vadd.f32 %v1055, 1.0
  %v1057 = vrcp.pop %v1056
  %v1058 = vmul.f32 %v1056, %v1057
  %v1059 = vsub.f32 1.0, %v1058
  %v1060 = vmul.f32 %v1057, %v1059
  %v1061 = vadd.f32 %v1057, %v1060
  %vm1062 = vweird.f32 %v1056
  %vm1063 = vweird.f32 %v1057
  %vm1064 = vmor %vm1062, %vm1063
  %v1065 = vsel %vm1064, %v1057, %v1061
  %v1066 = vand.u32 2147483647, %v1056
  %vm1067 = vcmp.eq.f32.partialorder %v1066, 8.507059e+37
  %v1068 = vand.u32 %v1056, 2147483648
  %v1069 = vor.u32 1.1754944e-38, %v1068
  %v1070 = vsel %vm1067, %v1069, %v1065
  %v1071 = vmul.f32 1.0, %v1070
  %1073 = vrot.lane.b32.xlu0 %v1046, 64
  %v1074 = vpop.permute.xlu0 %1073
  %v1076 = vmul.f32 %v1071, %v1074
  %v1077 = vmax.f32 %v1052, 1.0
  %1079 = vrot.lane.b32.xlu0 %v1077, 64
  %v1080 = vpop.permute.xlu0 %1079
  %v1082 = vrcp.pop %v1080
  %v1083 = vmul.f32 %v1080, %v1082
  %v1084 = vsub.f32 1.0, %v1083
  %v1085 = vmul.f32 %v1082, %v1084
  %v1086 = vadd.f32 %v1082, %v1085
  %vm1087 = vweird.f32 %v1080
  %vm1088 = vweird.f32 %v1082
  %vm1089 = vmor %vm1087, %vm1088
  %v1090 = vsel %vm1089, %v1082, %v1086
  %v1091 = vand.u32 2147483647, %v1080
  %vm1092 = vcmp.eq.f32.partialorder %v1091, 8.507059e+37
  %v1093 = vand.u32 %v1080, 2147483648
  %v1094 = vor.u32 1.1754944e-38, %v1093
  %v1095 = vsel %vm1092, %v1094, %v1090
  %v1096 = vmul.f32 %v1076, %v1095
  %v1097 = vsel %vm122, %v964, 0
  %1099 = vmatpush.msra.mxu0 0.0
  %1100 = vmatpush.msra.mxu0 0.0
  %1101 = vmatpush.msra.mxu0 0.0
  %1102 = vmatpush.msra.mxu0 0.0
  %1103 = vmatpush.msra.mxu0 0.0
  %1104 = vmatpush.msra.mxu0 0.0
  %1105 = vmatpush.msra.mxu0 0.0
  %1106 = vmatpush.msra.mxu0 0.0
  %1107 = vmatpush.msra.mxu0 0.0
  %1108 = vmatpush.msra.mxu0 0.0
  %1109 = vmatpush.msra.mxu0 0.0
  %1110 = vmatpush.msra.mxu0 0.0
  %1111 = vmatpush.msra.mxu0 %v32
  %1112 = vmatpush.msra.mxu0 %v31
  %1113 = vmatpush.msra.mxu0 %v30
  %1114 = vmatpush.msra.mxu0 %v29
  %1115 = vmatmul.f32.gmra.mxu0 %v1097
  %v1116 = vpop.f32.mrf.mxu0
  %v1117 = vadd.f32 0.0, %v1116
  %1118 = vdwg.mxu0
  %v1119 = vadd.f32 %v376, %v1117
  %v1120 = vadd.f32 %v1119, %v889
  %1122 = vrot.lane.b32.xlu0 %v1119, 32
  %v1123 = vpop.permute.xlu0 %1122
  %v1125 = vmax.f32 %v1120, %v1123
  %1127 = vrot.lane.b32.xlu0 %v1125, 96
  %v1128 = vpop.permute.xlu0 %1127
  %v1130 = vsub.f32 %v1119, %v1128
  %v1131 = vmul.f32 %v1130, 1.442695
  %v1132 = vpow.pop %v1131
  %v1133 = vsub.f32 %v1120, %v1125
  %v1134 = vmul.f32 %v1133, 1.442695
  %v1135 = vpow.pop %v1134
  %v1136 = vmul.f32 %v1135, %v911
  %v1137 = vtanh.pop %v1119
  %1139 = vrot.lane.b32.xlu0 %v1137, 64
  %v1140 = vpop.permute.xlu0 %1139
  %v1142 = vmul.f32 %v1132, %v1140
  %1144 = vrot.lane.b32.xlu0 %v1142, 32
  %v1145 = vpop.permute.xlu0 %1144
  %v1147 = vadd.f32 %v1136, %v1145
  %v1148 = vmul.f32 %v1135, %v917
  %1150 = vrot.lane.b32.xlu0 %v1132, 32
  %v1151 = vpop.permute.xlu0 %1150
  %v1153 = vadd.f32 %v1148, %v1151
  %v1154 = vxor.u32 %v1119, 2147483648
  %v1155 = vmul.f32 %v1154, 1.442695
  %v1156 = vpow.pop %v1155
  %v1157 = vadd.f32 %v1156, 1.0
  %v1158 = vrcp.pop %v1157
  %v1159 = vmul.f32 %v1157, %v1158
  %v1160 = vsub.f32 1.0, %v1159
  %v1161 = vmul.f32 %v1158, %v1160
  %v1162 = vadd.f32 %v1158, %v1161
  %vm1163 = vweird.f32 %v1157
  %vm1164 = vweird.f32 %v1158
  %vm1165 = vmor %vm1163, %vm1164
  %v1166 = vsel %vm1165, %v1158, %v1162
  %v1167 = vand.u32 2147483647, %v1157
  %vm1168 = vcmp.eq.f32.partialorder %v1167, 8.507059e+37
  %v1169 = vand.u32 %v1157, 2147483648
  %v1170 = vor.u32 1.1754944e-38, %v1169
  %v1171 = vsel %vm1168, %v1170, %v1166
  %v1172 = vmul.f32 1.0, %v1171
  %1174 = vrot.lane.b32.xlu0 %v1147, 64
  %v1175 = vpop.permute.xlu0 %1174
  %v1177 = vmul.f32 %v1172, %v1175
  %v1178 = vmax.f32 %v1153, 1.0
  %1180 = vrot.lane.b32.xlu0 %v1178, 64
  %v1181 = vpop.permute.xlu0 %1180
  %v1183 = vrcp.pop %v1181
  %v1184 = vmul.f32 %v1181, %v1183
  %v1185 = vsub.f32 1.0, %v1184
  %v1186 = vmul.f32 %v1183, %v1185
  %v1187 = vadd.f32 %v1183, %v1186
  %vm1188 = vweird.f32 %v1181
  %vm1189 = vweird.f32 %v1183
  %vm1190 = vmor %vm1188, %vm1189
  %v1191 = vsel %vm1190, %v1183, %v1187
  %v1192 = vand.u32 2147483647, %v1181
  %vm1193 = vcmp.eq.f32.partialorder %v1192, 8.507059e+37
  %v1194 = vand.u32 %v1181, 2147483648
  %v1195 = vor.u32 1.1754944e-38, %v1194
  %v1196 = vsel %vm1193, %v1195, %v1191
  %v1197 = vmul.f32 %v1177, %v1196
  %1199 = vrot.lane.b32.xlu0 %v1197, 32
  %v1200 = vpop.permute.xlu0 %1199
  %v1202 = vadd.f32 %v108, %v1200
  %v1203 = vsel %vm122, %v1202, 0.0
  %1204 = vadd.xlane.f32.xlu0 %v1203
  %v1205 = vpop.xlane.xlu0 %1204
  %v1206 = vmul.f32 %v1205, %v153
  %v1207 = vsub.f32 %v1202, %v1206
  %v1208 = vmul.f32 %v1207, %v1207
  %v1209 = vsel %vm122, %v1208, 0.0
  %1210 = vadd.xlane.f32.xlu0 %v1209
  %v1211 = vpop.xlane.xlu0 %1210
  %v1212 = vmul.f32 %v1211, %v153
  %v1213 = vadd.f32 %v1212, 1e-05
  %v1214 = vrsqrt.pop %v1213
  %v1215 = vmul.f32 %v1214, %v1213
  %v1216 = vmul.f32 %v1215, %v1214
  %v1217 = vmul.f32 0.5, %v1216
  %v1218 = vsub.f32 1.5, %v1217
  %v1219 = vmul.f32 %v1214, %v1218
  %vm1220 = vweird.f32 %v1213
  %vm1221 = vweird.f32 %v1214
  %vm1222 = vmor %vm1220, %vm1221
  %v1223 = vsel %vm1222, %v1214, %v1219
  %v1224 = vmul.f32 %v1207, %v1223
  %v1225 = vmul.f32 %v1224, %v518
  %v1226 = vadd.f32 %v1225, %v520
  %1228 = vrot.lane.b32.xlu0 %v1096, 64
  %v1229 = vpop.permute.xlu0 %1228
  %v1231 = vsel %vm122, %v1226, %v1229
  %v1233 = vsel %vm524, %v1231, 0
  %1235 = vmatpush.msra.mxu0 0.0
  %1236 = vmatpush.msra.mxu0 0.0
  %1237 = vmatpush.msra.mxu0 0.0
  %1238 = vmatpush.msra.mxu0 0.0
  %1239 = vmatpush.msra.mxu0 0.0
  %1240 = vmatpush.msra.mxu0 0.0
  %1241 = vmatpush.msra.mxu0 0.0
  %1242 = vmatpush.msra.mxu0 0.0
  %1243 = vmatpush.msra.mxu0 %v40
  %1244 = vmatpush.msra.mxu0 %v39
  %1245 = vmatpush.msra.mxu0 %v38
  %1246 = vmatpush.msra.mxu0 %v37
  %1247 = vmatpush.msra.mxu0 %v36
  %1248 = vmatpush.msra.mxu0 %v35
  %1249 = vmatpush.msra.mxu0 %v34
  %1250 = vmatpush.msra.mxu0 %v33
  %1251 = vmatmul.f32.gmra.mxu0 %v1233
  %v1252 = vpop.f32.mrf.mxu0
  %v1253 = vadd.f32 %v523, %v1252
  %1254 = vdwg.mxu0
  %v1255 = vadd.f32 %v1253, %v1024
  %1257 = vrot.lane.b32.xlu0 %v1253, 32
  %v1258 = vpop.permute.xlu0 %1257
  %v1260 = vmax.f32 %v1255, %v1258
  %1262 = vrot.lane.b32.xlu0 %v1260, 96
  %v1263 = vpop.permute.xlu0 %1262
  %v1265 = vsub.f32 %v1253, %v1263
  %v1266 = vmul.f32 %v1265, 1.442695
  %v1267 = vpow.pop %v1266
  %v1268 = vsub.f32 %v1255, %v1260
  %v1269 = vmul.f32 %v1268, 1.442695
  %v1270 = vpow.pop %v1269
  %v1271 = vmul.f32 %v1270, %v1046
  %v1272 = vtanh.pop %v1253
  %1274 = vrot.lane.b32.xlu0 %v1272, 64
  %v1275 = vpop.permute.xlu0 %1274
  %v1277 = vmul.f32 %v1267, %v1275
  %1279 = vrot.lane.b32.xlu0 %v1277, 32
  %v1280 = vpop.permute.xlu0 %1279
  %v1282 = vadd.f32 %v1271, %v1280
  %v1283 = vmul.f32 %v1270, %v1052
  %1285 = vrot.lane.b32.xlu0 %v1267, 32
  %v1286 = vpop.permute.xlu0 %1285
  %v1288 = vadd.f32 %v1283, %v1286
  %v1289 = vxor.u32 %v1253, 2147483648
  %v1290 = vmul.f32 %v1289, 1.442695
  %v1291 = vpow.pop %v1290
  %v1292 = vadd.f32 %v1291, 1.0
  %v1293 = vrcp.pop %v1292
  %v1294 = vmul.f32 %v1292, %v1293
  %v1295 = vsub.f32 1.0, %v1294
  %v1296 = vmul.f32 %v1293, %v1295
  %v1297 = vadd.f32 %v1293, %v1296
  %vm1298 = vweird.f32 %v1292
  %vm1299 = vweird.f32 %v1293
  %vm1300 = vmor %vm1298, %vm1299
  %v1301 = vsel %vm1300, %v1293, %v1297
  %v1302 = vand.u32 2147483647, %v1292
  %vm1303 = vcmp.eq.f32.partialorder %v1302, 8.507059e+37
  %v1304 = vand.u32 %v1292, 2147483648
  %v1305 = vor.u32 1.1754944e-38, %v1304
  %v1306 = vsel %vm1303, %v1305, %v1301
  %v1307 = vmul.f32 1.0, %v1306
  %1309 = vrot.lane.b32.xlu0 %v1282, 64
  %v1310 = vpop.permute.xlu0 %1309
  %v1312 = vmul.f32 %v1307, %v1310
  %v1313 = vmax.f32 %v1288, 1.0
  %1315 = vrot.lane.b32.xlu0 %v1313, 64
  %v1316 = vpop.permute.xlu0 %1315
  %v1318 = vrcp.pop %v1316
  %v1319 = vmul.f32 %v1316, %v1318
  %v1320 = vsub.f32 1.0, %v1319
  %v1321 = vmul.f32 %v1318, %v1320
  %v1322 = vadd.f32 %v1318, %v1321
  %vm1323 = vweird.f32 %v1316
  %vm1324 = vweird.f32 %v1318
  %vm1325 = vmor %vm1323, %vm1324
  %v1326 = vsel %vm1325, %v1318, %v1322
  %v1327 = vand.u32 2147483647, %v1316
  %vm1328 = vcmp.eq.f32.partialorder %v1327, 8.507059e+37
  %v1329 = vand.u32 %v1316, 2147483648
  %v1330 = vor.u32 1.1754944e-38, %v1329
  %v1331 = vsel %vm1328, %v1330, %v1326
  %v1332 = vmul.f32 %v1312, %v1331
  %v1333 = vsel %vm122, %v1200, 0
  %1335 = vmatpush.msra.mxu0 0.0
  %1336 = vmatpush.msra.mxu0 0.0
  %1337 = vmatpush.msra.mxu0 0.0
  %1338 = vmatpush.msra.mxu0 0.0
  %1339 = vmatpush.msra.mxu0 0.0
  %1340 = vmatpush.msra.mxu0 0.0
  %1341 = vmatpush.msra.mxu0 0.0
  %1342 = vmatpush.msra.mxu0 0.0
  %1343 = vmatpush.msra.mxu0 0.0
  %1344 = vmatpush.msra.mxu0 0.0
  %1345 = vmatpush.msra.mxu0 0.0
  %1346 = vmatpush.msra.mxu0 0.0
  %1347 = vmatpush.msra.mxu0 %v32
  %1348 = vmatpush.msra.mxu0 %v31
  %1349 = vmatpush.msra.mxu0 %v30
  %1350 = vmatpush.msra.mxu0 %v29
  %1351 = vmatmul.f32.gmra.mxu0 %v1333
  %v1352 = vpop.f32.mrf.mxu0
  %v1353 = vadd.f32 0.0, %v1352
  %1354 = vdwg.mxu0
  %v1355 = vadd.f32 %v379, %v1353
  %v1356 = vadd.f32 %v1355, %v1125
  %1358 = vrot.lane.b32.xlu0 %v1355, 32
  %v1359 = vpop.permute.xlu0 %1358
  %v1361 = vmax.f32 %v1356, %v1359
  %1363 = vrot.lane.b32.xlu0 %v1361, 96
  %v1364 = vpop.permute.xlu0 %1363
  %v1366 = vsub.f32 %v1355, %v1364
  %v1367 = vmul.f32 %v1366, 1.442695
  %v1368 = vpow.pop %v1367
  %v1369 = vsub.f32 %v1356, %v1361
  %v1370 = vmul.f32 %v1369, 1.442695
  %v1371 = vpow.pop %v1370
  %v1372 = vmul.f32 %v1371, %v1147
  %v1373 = vtanh.pop %v1355
  %1375 = vrot.lane.b32.xlu0 %v1373, 64
  %v1376 = vpop.permute.xlu0 %1375
  %v1378 = vmul.f32 %v1368, %v1376
  %1380 = vrot.lane.b32.xlu0 %v1378, 32
  %v1381 = vpop.permute.xlu0 %1380
  %v1383 = vadd.f32 %v1372, %v1381
  %v1384 = vmul.f32 %v1371, %v1153
  %1386 = vrot.lane.b32.xlu0 %v1368, 32
  %v1387 = vpop.permute.xlu0 %1386
  %v1389 = vadd.f32 %v1384, %v1387
  %v1390 = vxor.u32 %v1355, 2147483648
  %v1391 = vmul.f32 %v1390, 1.442695
  %v1392 = vpow.pop %v1391
  %v1393 = vadd.f32 %v1392, 1.0
  %v1394 = vrcp.pop %v1393
  %v1395 = vmul.f32 %v1393, %v1394
  %v1396 = vsub.f32 1.0, %v1395
  %v1397 = vmul.f32 %v1394, %v1396
  %v1398 = vadd.f32 %v1394, %v1397
  %vm1399 = vweird.f32 %v1393
  %vm1400 = vweird.f32 %v1394
  %vm1401 = vmor %vm1399, %vm1400
  %v1402 = vsel %vm1401, %v1394, %v1398
  %v1403 = vand.u32 2147483647, %v1393
  %vm1404 = vcmp.eq.f32.partialorder %v1403, 8.507059e+37
  %v1405 = vand.u32 %v1393, 2147483648
  %v1406 = vor.u32 1.1754944e-38, %v1405
  %v1407 = vsel %vm1404, %v1406, %v1402
  %v1408 = vmul.f32 1.0, %v1407
  %1410 = vrot.lane.b32.xlu0 %v1383, 64
  %v1411 = vpop.permute.xlu0 %1410
  %v1413 = vmul.f32 %v1408, %v1411
  %v1414 = vmax.f32 %v1389, 1.0
  %1416 = vrot.lane.b32.xlu0 %v1414, 64
  %v1417 = vpop.permute.xlu0 %1416
  %v1419 = vrcp.pop %v1417
  %v1420 = vmul.f32 %v1417, %v1419
  %v1421 = vsub.f32 1.0, %v1420
  %v1422 = vmul.f32 %v1419, %v1421
  %v1423 = vadd.f32 %v1419, %v1422
  %vm1424 = vweird.f32 %v1417
  %vm1425 = vweird.f32 %v1419
  %vm1426 = vmor %vm1424, %vm1425
  %v1427 = vsel %vm1426, %v1419, %v1423
  %v1428 = vand.u32 2147483647, %v1417
  %vm1429 = vcmp.eq.f32.partialorder %v1428, 8.507059e+37
  %v1430 = vand.u32 %v1417, 2147483648
  %v1431 = vor.u32 1.1754944e-38, %v1430
  %v1432 = vsel %vm1429, %v1431, %v1427
  %v1433 = vmul.f32 %v1413, %v1432
  %1435 = vrot.lane.b32.xlu0 %v1433, 32
  %v1436 = vpop.permute.xlu0 %1435
  %v1438 = vadd.f32 %v111, %v1436
  %v1439 = vsel %vm122, %v1438, 0.0
  %1440 = vadd.xlane.f32.xlu0 %v1439
  %v1441 = vpop.xlane.xlu0 %1440
  %v1442 = vmul.f32 %v1441, %v153
  %v1443 = vsub.f32 %v1438, %v1442
  %v1444 = vmul.f32 %v1443, %v1443
  %v1445 = vsel %vm122, %v1444, 0.0
  %1446 = vadd.xlane.f32.xlu0 %v1445
  %v1447 = vpop.xlane.xlu0 %1446
  %v1448 = vmul.f32 %v1447, %v153
  %v1449 = vadd.f32 %v1448, 1e-05
  %v1450 = vrsqrt.pop %v1449
  %v1451 = vmul.f32 %v1450, %v1449
  %v1452 = vmul.f32 %v1451, %v1450
  %v1453 = vmul.f32 0.5, %v1452
  %v1454 = vsub.f32 1.5, %v1453
  %v1455 = vmul.f32 %v1450, %v1454
  %vm1456 = vweird.f32 %v1449
  %vm1457 = vweird.f32 %v1450
  %vm1458 = vmor %vm1456, %vm1457
  %v1459 = vsel %vm1458, %v1450, %v1455
  %v1460 = vmul.f32 %v1443, %v1459
  %v1461 = vmul.f32 %v1460, %v518
  %v1462 = vadd.f32 %v1461, %v520
  %1464 = vrot.lane.b32.xlu0 %v1332, 64
  %v1465 = vpop.permute.xlu0 %1464
  %v1467 = vsel %vm122, %v1462, %v1465
  %v1469 = vsel %vm524, %v1467, 0
  %1471 = vmatpush.msra.mxu0 0.0
  %1472 = vmatpush.msra.mxu0 0.0
  %1473 = vmatpush.msra.mxu0 0.0
  %1474 = vmatpush.msra.mxu0 0.0
  %1475 = vmatpush.msra.mxu0 0.0
  %1476 = vmatpush.msra.mxu0 0.0
  %1477 = vmatpush.msra.mxu0 0.0
  %1478 = vmatpush.msra.mxu0 0.0
  %1479 = vmatpush.msra.mxu0 %v40
  %1480 = vmatpush.msra.mxu0 %v39
  %1481 = vmatpush.msra.mxu0 %v38
  %1482 = vmatpush.msra.mxu0 %v37
  %1483 = vmatpush.msra.mxu0 %v36
  %1484 = vmatpush.msra.mxu0 %v35
  %1485 = vmatpush.msra.mxu0 %v34
  %1486 = vmatpush.msra.mxu0 %v33
  %1487 = vmatmul.f32.gmra.mxu0 %v1469
  %v1488 = vpop.f32.mrf.mxu0
  %v1489 = vadd.f32 %v523, %v1488
  %1490 = vdwg.mxu0
  %v1491 = vadd.f32 %v1489, %v1260
  %1493 = vrot.lane.b32.xlu0 %v1489, 32
  %v1494 = vpop.permute.xlu0 %1493
  %v1496 = vmax.f32 %v1491, %v1494
  %1498 = vrot.lane.b32.xlu0 %v1496, 96
  %v1499 = vpop.permute.xlu0 %1498
  %v1501 = vsub.f32 %v1489, %v1499
  %v1502 = vmul.f32 %v1501, 1.442695
  %v1503 = vpow.pop %v1502
  %v1504 = vsub.f32 %v1491, %v1496
  %v1505 = vmul.f32 %v1504, 1.442695
  %v1506 = vpow.pop %v1505
  %v1507 = vmul.f32 %v1506, %v1282
  %v1508 = vtanh.pop %v1489
  %1510 = vrot.lane.b32.xlu0 %v1508, 64
  %v1511 = vpop.permute.xlu0 %1510
  %v1513 = vmul.f32 %v1503, %v1511
  %1515 = vrot.lane.b32.xlu0 %v1513, 32
  %v1516 = vpop.permute.xlu0 %1515
  %v1518 = vadd.f32 %v1507, %v1516
  %v1519 = vmul.f32 %v1506, %v1288
  %1521 = vrot.lane.b32.xlu0 %v1503, 32
  %v1522 = vpop.permute.xlu0 %1521
  %v1524 = vadd.f32 %v1519, %v1522
  %v1525 = vxor.u32 %v1489, 2147483648
  %v1526 = vmul.f32 %v1525, 1.442695
  %v1527 = vpow.pop %v1526
  %v1528 = vadd.f32 %v1527, 1.0
  %v1529 = vrcp.pop %v1528
  %v1530 = vmul.f32 %v1528, %v1529
  %v1531 = vsub.f32 1.0, %v1530
  %v1532 = vmul.f32 %v1529, %v1531
  %v1533 = vadd.f32 %v1529, %v1532
  %vm1534 = vweird.f32 %v1528
  %vm1535 = vweird.f32 %v1529
  %vm1536 = vmor %vm1534, %vm1535
  %v1537 = vsel %vm1536, %v1529, %v1533
  %v1538 = vand.u32 2147483647, %v1528
  %vm1539 = vcmp.eq.f32.partialorder %v1538, 8.507059e+37
  %v1540 = vand.u32 %v1528, 2147483648
  %v1541 = vor.u32 1.1754944e-38, %v1540
  %v1542 = vsel %vm1539, %v1541, %v1537
  %v1543 = vmul.f32 1.0, %v1542
  %1545 = vrot.lane.b32.xlu0 %v1518, 64
  %v1546 = vpop.permute.xlu0 %1545
  %v1548 = vmul.f32 %v1543, %v1546
  %v1549 = vmax.f32 %v1524, 1.0
  %1551 = vrot.lane.b32.xlu0 %v1549, 64
  %v1552 = vpop.permute.xlu0 %1551
  %v1554 = vrcp.pop %v1552
  %v1555 = vmul.f32 %v1552, %v1554
  %v1556 = vsub.f32 1.0, %v1555
  %v1557 = vmul.f32 %v1554, %v1556
  %v1558 = vadd.f32 %v1554, %v1557
  %vm1559 = vweird.f32 %v1552
  %vm1560 = vweird.f32 %v1554
  %vm1561 = vmor %vm1559, %vm1560
  %v1562 = vsel %vm1561, %v1554, %v1558
  %v1563 = vand.u32 2147483647, %v1552
  %vm1564 = vcmp.eq.f32.partialorder %v1563, 8.507059e+37
  %v1565 = vand.u32 %v1552, 2147483648
  %v1566 = vor.u32 1.1754944e-38, %v1565
  %v1567 = vsel %vm1564, %v1566, %v1562
  %v1568 = vmul.f32 %v1548, %v1567
  %v1569 = vsel %vm122, %v1436, 0
  %1571 = vmatpush.msra.mxu0 0.0
  %1572 = vmatpush.msra.mxu0 0.0
  %1573 = vmatpush.msra.mxu0 0.0
  %1574 = vmatpush.msra.mxu0 0.0
  %1575 = vmatpush.msra.mxu0 0.0
  %1576 = vmatpush.msra.mxu0 0.0
  %1577 = vmatpush.msra.mxu0 0.0
  %1578 = vmatpush.msra.mxu0 0.0
  %1579 = vmatpush.msra.mxu0 0.0
  %1580 = vmatpush.msra.mxu0 0.0
  %1581 = vmatpush.msra.mxu0 0.0
  %1582 = vmatpush.msra.mxu0 0.0
  %1583 = vmatpush.msra.mxu0 %v32
  %1584 = vmatpush.msra.mxu0 %v31
  %1585 = vmatpush.msra.mxu0 %v30
  %1586 = vmatpush.msra.mxu0 %v29
  %1587 = vmatmul.f32.gmra.mxu0 %v1569
  %v1588 = vpop.f32.mrf.mxu0
  %v1589 = vadd.f32 0.0, %v1588
  %1590 = vdwg.mxu0
  %v1591 = vadd.f32 %v382, %v1589
  %v1592 = vadd.f32 %v1591, %v1361
  %1594 = vrot.lane.b32.xlu0 %v1591, 32
  %v1595 = vpop.permute.xlu0 %1594
  %v1597 = vmax.f32 %v1592, %v1595
  %1599 = vrot.lane.b32.xlu0 %v1597, 96
  %v1600 = vpop.permute.xlu0 %1599
  %v1602 = vsub.f32 %v1591, %v1600
  %v1603 = vmul.f32 %v1602, 1.442695
  %v1604 = vpow.pop %v1603
  %v1605 = vsub.f32 %v1592, %v1597
  %v1606 = vmul.f32 %v1605, 1.442695
  %v1607 = vpow.pop %v1606
  %v1608 = vmul.f32 %v1607, %v1383
  %v1609 = vtanh.pop %v1591
  %1611 = vrot.lane.b32.xlu0 %v1609, 64
  %v1612 = vpop.permute.xlu0 %1611
  %v1614 = vmul.f32 %v1604, %v1612
  %1616 = vrot.lane.b32.xlu0 %v1614, 32
  %v1617 = vpop.permute.xlu0 %1616
  %v1619 = vadd.f32 %v1608, %v1617
  %v1620 = vmul.f32 %v1607, %v1389
  %1622 = vrot.lane.b32.xlu0 %v1604, 32
  %v1623 = vpop.permute.xlu0 %1622
  %v1625 = vadd.f32 %v1620, %v1623
  %v1626 = vxor.u32 %v1591, 2147483648
  %v1627 = vmul.f32 %v1626, 1.442695
  %v1628 = vpow.pop %v1627
  %v1629 = vadd.f32 %v1628, 1.0
  %v1630 = vrcp.pop %v1629
  %v1631 = vmul.f32 %v1629, %v1630
  %v1632 = vsub.f32 1.0, %v1631
  %v1633 = vmul.f32 %v1630, %v1632
  %v1634 = vadd.f32 %v1630, %v1633
  %vm1635 = vweird.f32 %v1629
  %vm1636 = vweird.f32 %v1630
  %vm1637 = vmor %vm1635, %vm1636
  %v1638 = vsel %vm1637, %v1630, %v1634
  %v1639 = vand.u32 2147483647, %v1629
  %vm1640 = vcmp.eq.f32.partialorder %v1639, 8.507059e+37
  %v1641 = vand.u32 %v1629, 2147483648
  %v1642 = vor.u32 1.1754944e-38, %v1641
  %v1643 = vsel %vm1640, %v1642, %v1638
  %v1644 = vmul.f32 1.0, %v1643
  %1646 = vrot.lane.b32.xlu0 %v1619, 64
  %v1647 = vpop.permute.xlu0 %1646
  %v1649 = vmul.f32 %v1644, %v1647
  %v1650 = vmax.f32 %v1625, 1.0
  %1652 = vrot.lane.b32.xlu0 %v1650, 64
  %v1653 = vpop.permute.xlu0 %1652
  %v1655 = vrcp.pop %v1653
  %v1656 = vmul.f32 %v1653, %v1655
  %v1657 = vsub.f32 1.0, %v1656
  %v1658 = vmul.f32 %v1655, %v1657
  %v1659 = vadd.f32 %v1655, %v1658
  %vm1660 = vweird.f32 %v1653
  %vm1661 = vweird.f32 %v1655
  %vm1662 = vmor %vm1660, %vm1661
  %v1663 = vsel %vm1662, %v1655, %v1659
  %v1664 = vand.u32 2147483647, %v1653
  %vm1665 = vcmp.eq.f32.partialorder %v1664, 8.507059e+37
  %v1666 = vand.u32 %v1653, 2147483648
  %v1667 = vor.u32 1.1754944e-38, %v1666
  %v1668 = vsel %vm1665, %v1667, %v1663
  %v1669 = vmul.f32 %v1649, %v1668
  %1671 = vrot.lane.b32.xlu0 %v1669, 32
  %v1672 = vpop.permute.xlu0 %1671
  %v1674 = vadd.f32 %v114, %v1672
  %v1675 = vsel %vm122, %v1674, 0.0
  %1676 = vadd.xlane.f32.xlu0 %v1675
  %v1677 = vpop.xlane.xlu0 %1676
  %v1678 = vmul.f32 %v1677, %v153
  %v1679 = vsub.f32 %v1674, %v1678
  %v1680 = vmul.f32 %v1679, %v1679
  %v1681 = vsel %vm122, %v1680, 0.0
  %1682 = vadd.xlane.f32.xlu0 %v1681
  %v1683 = vpop.xlane.xlu0 %1682
  %v1684 = vmul.f32 %v1683, %v153
  %v1685 = vadd.f32 %v1684, 1e-05
  %v1686 = vrsqrt.pop %v1685
  %v1687 = vmul.f32 %v1686, %v1685
  %v1688 = vmul.f32 %v1687, %v1686
  %v1689 = vmul.f32 0.5, %v1688
  %v1690 = vsub.f32 1.5, %v1689
  %v1691 = vmul.f32 %v1686, %v1690
  %vm1692 = vweird.f32 %v1685
  %vm1693 = vweird.f32 %v1686
  %vm1694 = vmor %vm1692, %vm1693
  %v1695 = vsel %vm1694, %v1686, %v1691
  %v1696 = vmul.f32 %v1679, %v1695
  %v1697 = vmul.f32 %v1696, %v518
  %v1698 = vadd.f32 %v1697, %v520
  %1700 = vrot.lane.b32.xlu0 %v1568, 64
  %v1701 = vpop.permute.xlu0 %1700
  %v1703 = vsel %vm122, %v1698, %v1701
  %v1705 = vsel %vm524, %v1703, 0
  %1707 = vmatpush.msra.mxu0 0.0
  %1708 = vmatpush.msra.mxu0 0.0
  %1709 = vmatpush.msra.mxu0 0.0
  %1710 = vmatpush.msra.mxu0 0.0
  %1711 = vmatpush.msra.mxu0 0.0
  %1712 = vmatpush.msra.mxu0 0.0
  %1713 = vmatpush.msra.mxu0 0.0
  %1714 = vmatpush.msra.mxu0 0.0
  %1715 = vmatpush.msra.mxu0 %v40
  %1716 = vmatpush.msra.mxu0 %v39
  %1717 = vmatpush.msra.mxu0 %v38
  %1718 = vmatpush.msra.mxu0 %v37
  %1719 = vmatpush.msra.mxu0 %v36
  %1720 = vmatpush.msra.mxu0 %v35
  %1721 = vmatpush.msra.mxu0 %v34
  %1722 = vmatpush.msra.mxu0 %v33
  %1723 = vmatmul.f32.gmra.mxu0 %v1705
  %v1724 = vpop.f32.mrf.mxu0
  %v1725 = vadd.f32 %v523, %v1724
  %1726 = vdwg.mxu0
  %v1727 = vadd.f32 %v1725, %v1496
  %1729 = vrot.lane.b32.xlu0 %v1725, 32
  %v1730 = vpop.permute.xlu0 %1729
  %v1732 = vmax.f32 %v1727, %v1730
  %1734 = vrot.lane.b32.xlu0 %v1732, 96
  %v1735 = vpop.permute.xlu0 %1734
  %v1737 = vsub.f32 %v1725, %v1735
  %v1738 = vmul.f32 %v1737, 1.442695
  %v1739 = vpow.pop %v1738
  %v1740 = vsub.f32 %v1727, %v1732
  %v1741 = vmul.f32 %v1740, 1.442695
  %v1742 = vpow.pop %v1741
  %v1743 = vmul.f32 %v1742, %v1518
  %v1744 = vtanh.pop %v1725
  %1746 = vrot.lane.b32.xlu0 %v1744, 64
  %v1747 = vpop.permute.xlu0 %1746
  %v1749 = vmul.f32 %v1739, %v1747
  %1751 = vrot.lane.b32.xlu0 %v1749, 32
  %v1752 = vpop.permute.xlu0 %1751
  %v1754 = vadd.f32 %v1743, %v1752
  %v1755 = vmul.f32 %v1742, %v1524
  %1757 = vrot.lane.b32.xlu0 %v1739, 32
  %v1758 = vpop.permute.xlu0 %1757
  %v1760 = vadd.f32 %v1755, %v1758
  %v1761 = vxor.u32 %v1725, 2147483648
  %v1762 = vmul.f32 %v1761, 1.442695
  %v1763 = vpow.pop %v1762
  %v1764 = vadd.f32 %v1763, 1.0
  %v1765 = vrcp.pop %v1764
  %v1766 = vmul.f32 %v1764, %v1765
  %v1767 = vsub.f32 1.0, %v1766
  %v1768 = vmul.f32 %v1765, %v1767
  %v1769 = vadd.f32 %v1765, %v1768
  %vm1770 = vweird.f32 %v1764
  %vm1771 = vweird.f32 %v1765
  %vm1772 = vmor %vm1770, %vm1771
  %v1773 = vsel %vm1772, %v1765, %v1769
  %v1774 = vand.u32 2147483647, %v1764
  %vm1775 = vcmp.eq.f32.partialorder %v1774, 8.507059e+37
  %v1776 = vand.u32 %v1764, 2147483648
  %v1777 = vor.u32 1.1754944e-38, %v1776
  %v1778 = vsel %vm1775, %v1777, %v1773
  %v1779 = vmul.f32 1.0, %v1778
  %1781 = vrot.lane.b32.xlu0 %v1754, 64
  %v1782 = vpop.permute.xlu0 %1781
  %v1784 = vmul.f32 %v1779, %v1782
  %v1785 = vmax.f32 %v1760, 1.0
  %1787 = vrot.lane.b32.xlu0 %v1785, 64
  %v1788 = vpop.permute.xlu0 %1787
  %v1790 = vrcp.pop %v1788
  %v1791 = vmul.f32 %v1788, %v1790
  %v1792 = vsub.f32 1.0, %v1791
  %v1793 = vmul.f32 %v1790, %v1792
  %v1794 = vadd.f32 %v1790, %v1793
  %vm1795 = vweird.f32 %v1788
  %vm1796 = vweird.f32 %v1790
  %vm1797 = vmor %vm1795, %vm1796
  %v1798 = vsel %vm1797, %v1790, %v1794
  %v1799 = vand.u32 2147483647, %v1788
  %vm1800 = vcmp.eq.f32.partialorder %v1799, 8.507059e+37
  %v1801 = vand.u32 %v1788, 2147483648
  %v1802 = vor.u32 1.1754944e-38, %v1801
  %v1803 = vsel %vm1800, %v1802, %v1798
  %v1804 = vmul.f32 %v1784, %v1803
  %v1805 = vsel %vm122, %v1672, 0
  %1807 = vmatpush.msra.mxu0 0.0
  %1808 = vmatpush.msra.mxu0 0.0
  %1809 = vmatpush.msra.mxu0 0.0
  %1810 = vmatpush.msra.mxu0 0.0
  %1811 = vmatpush.msra.mxu0 0.0
  %1812 = vmatpush.msra.mxu0 0.0
  %1813 = vmatpush.msra.mxu0 0.0
  %1814 = vmatpush.msra.mxu0 0.0
  %1815 = vmatpush.msra.mxu0 0.0
  %1816 = vmatpush.msra.mxu0 0.0
  %1817 = vmatpush.msra.mxu0 0.0
  %1818 = vmatpush.msra.mxu0 0.0
  %1819 = vmatpush.msra.mxu0 %v32
  %1820 = vmatpush.msra.mxu0 %v31
  %1821 = vmatpush.msra.mxu0 %v30
  %1822 = vmatpush.msra.mxu0 %v29
  %1823 = vmatmul.f32.gmra.mxu0 %v1805
  %v1824 = vpop.f32.mrf.mxu0
  %v1825 = vadd.f32 0.0, %v1824
  %1826 = vdwg.mxu0
  %v1827 = vadd.f32 %v385, %v1825
  %v1828 = vadd.f32 %v1827, %v1597
  %1830 = vrot.lane.b32.xlu0 %v1827, 32
  %v1831 = vpop.permute.xlu0 %1830
  %v1833 = vmax.f32 %v1828, %v1831
  %1835 = vrot.lane.b32.xlu0 %v1833, 96
  %v1836 = vpop.permute.xlu0 %1835
  %v1838 = vsub.f32 %v1827, %v1836
  %v1839 = vmul.f32 %v1838, 1.442695
  %v1840 = vpow.pop %v1839
  %v1841 = vsub.f32 %v1828, %v1833
  %v1842 = vmul.f32 %v1841, 1.442695
  %v1843 = vpow.pop %v1842
  %v1844 = vmul.f32 %v1843, %v1619
  %v1845 = vtanh.pop %v1827
  %1847 = vrot.lane.b32.xlu0 %v1845, 64
  %v1848 = vpop.permute.xlu0 %1847
  %v1850 = vmul.f32 %v1840, %v1848
  %1852 = vrot.lane.b32.xlu0 %v1850, 32
  %v1853 = vpop.permute.xlu0 %1852
  %v1855 = vadd.f32 %v1844, %v1853
  %v1856 = vmul.f32 %v1843, %v1625
  %1858 = vrot.lane.b32.xlu0 %v1840, 32
  %v1859 = vpop.permute.xlu0 %1858
  %v1861 = vadd.f32 %v1856, %v1859
  %v1862 = vxor.u32 %v1827, 2147483648
  %v1863 = vmul.f32 %v1862, 1.442695
  %v1864 = vpow.pop %v1863
  %v1865 = vadd.f32 %v1864, 1.0
  %v1866 = vrcp.pop %v1865
  %v1867 = vmul.f32 %v1865, %v1866
  %v1868 = vsub.f32 1.0, %v1867
  %v1869 = vmul.f32 %v1866, %v1868
  %v1870 = vadd.f32 %v1866, %v1869
  %vm1871 = vweird.f32 %v1865
  %vm1872 = vweird.f32 %v1866
  %vm1873 = vmor %vm1871, %vm1872
  %v1874 = vsel %vm1873, %v1866, %v1870
  %v1875 = vand.u32 2147483647, %v1865
  %vm1876 = vcmp.eq.f32.partialorder %v1875, 8.507059e+37
  %v1877 = vand.u32 %v1865, 2147483648
  %v1878 = vor.u32 1.1754944e-38, %v1877
  %v1879 = vsel %vm1876, %v1878, %v1874
  %v1880 = vmul.f32 1.0, %v1879
  %1882 = vrot.lane.b32.xlu0 %v1855, 64
  %v1883 = vpop.permute.xlu0 %1882
  %v1885 = vmul.f32 %v1880, %v1883
  %v1886 = vmax.f32 %v1861, 1.0
  %1888 = vrot.lane.b32.xlu0 %v1886, 64
  %v1889 = vpop.permute.xlu0 %1888
  %v1891 = vrcp.pop %v1889
  %v1892 = vmul.f32 %v1889, %v1891
  %v1893 = vsub.f32 1.0, %v1892
  %v1894 = vmul.f32 %v1891, %v1893
  %v1895 = vadd.f32 %v1891, %v1894
  %vm1896 = vweird.f32 %v1889
  %vm1897 = vweird.f32 %v1891
  %vm1898 = vmor %vm1896, %vm1897
  %v1899 = vsel %vm1898, %v1891, %v1895
  %v1900 = vand.u32 2147483647, %v1889
  %vm1901 = vcmp.eq.f32.partialorder %v1900, 8.507059e+37
  %v1902 = vand.u32 %v1889, 2147483648
  %v1903 = vor.u32 1.1754944e-38, %v1902
  %v1904 = vsel %vm1901, %v1903, %v1899
  %v1905 = vmul.f32 %v1885, %v1904
  %1907 = vrot.lane.b32.xlu0 %v1905, 32
  %v1908 = vpop.permute.xlu0 %1907
  %v1910 = vadd.f32 %v117, %v1908
  %v1911 = vsel %vm122, %v1910, 0.0
  %1912 = vadd.xlane.f32.xlu0 %v1911
  %v1913 = vpop.xlane.xlu0 %1912
  %v1914 = vmul.f32 %v1913, %v153
  %v1915 = vsub.f32 %v1910, %v1914
  %v1916 = vmul.f32 %v1915, %v1915
  %v1917 = vsel %vm122, %v1916, 0.0
  %1918 = vadd.xlane.f32.xlu0 %v1917
  %v1919 = vpop.xlane.xlu0 %1918
  %v1920 = vmul.f32 %v1919, %v153
  %v1921 = vadd.f32 %v1920, 1e-05
  %v1922 = vrsqrt.pop %v1921
  %v1923 = vmul.f32 %v1922, %v1921
  %v1924 = vmul.f32 %v1923, %v1922
  %v1925 = vmul.f32 0.5, %v1924
  %v1926 = vsub.f32 1.5, %v1925
  %v1927 = vmul.f32 %v1922, %v1926
  %vm1928 = vweird.f32 %v1921
  %vm1929 = vweird.f32 %v1922
  %vm1930 = vmor %vm1928, %vm1929
  %v1931 = vsel %vm1930, %v1922, %v1927
  %v1932 = vmul.f32 %v1915, %v1931
  %v1933 = vmul.f32 %v1932, %v518
  %v1934 = vadd.f32 %v1933, %v520
  %1936 = vrot.lane.b32.xlu0 %v1804, 64
  %v1937 = vpop.permute.xlu0 %1936
  %v1939 = vsel %vm122, %v1934, %v1937
  %v1941 = vsel %vm524, %v1939, 0
  %1943 = vmatpush.msra.mxu0 0.0
  %1944 = vmatpush.msra.mxu0 0.0
  %1945 = vmatpush.msra.mxu0 0.0
  %1946 = vmatpush.msra.mxu0 0.0
  %1947 = vmatpush.msra.mxu0 0.0
  %1948 = vmatpush.msra.mxu0 0.0
  %1949 = vmatpush.msra.mxu0 0.0
  %1950 = vmatpush.msra.mxu0 0.0
  %1951 = vmatpush.msra.mxu0 %v40
  %1952 = vmatpush.msra.mxu0 %v39
  %1953 = vmatpush.msra.mxu0 %v38
  %1954 = vmatpush.msra.mxu0 %v37
  %1955 = vmatpush.msra.mxu0 %v36
  %1956 = vmatpush.msra.mxu0 %v35
  %1957 = vmatpush.msra.mxu0 %v34
  %1958 = vmatpush.msra.mxu0 %v33
  %1959 = vmatmul.f32.gmra.mxu0 %v1941
  %v1960 = vpop.f32.mrf.mxu0
  %v1961 = vadd.f32 %v523, %v1960
  %1962 = vdwg.mxu0
  %v1963 = vadd.f32 %v1961, %v1732
  %1965 = vrot.lane.b32.xlu0 %v1961, 32
  %v1966 = vpop.permute.xlu0 %1965
  %v1968 = vmax.f32 %v1963, %v1966
  %1970 = vrot.lane.b32.xlu0 %v1968, 96
  %v1971 = vpop.permute.xlu0 %1970
  %v1973 = vsub.f32 %v1961, %v1971
  %v1974 = vmul.f32 %v1973, 1.442695
  %v1975 = vpow.pop %v1974
  %v1976 = vsub.f32 %v1963, %v1968
  %v1977 = vmul.f32 %v1976, 1.442695
  %v1978 = vpow.pop %v1977
  %v1979 = vmul.f32 %v1978, %v1754
  %v1980 = vtanh.pop %v1961
  %1982 = vrot.lane.b32.xlu0 %v1980, 64
  %v1983 = vpop.permute.xlu0 %1982
  %v1985 = vmul.f32 %v1975, %v1983
  %1987 = vrot.lane.b32.xlu0 %v1985, 32
  %v1988 = vpop.permute.xlu0 %1987
  %v1990 = vadd.f32 %v1979, %v1988
  %v1991 = vmul.f32 %v1978, %v1760
  %1993 = vrot.lane.b32.xlu0 %v1975, 32
  %v1994 = vpop.permute.xlu0 %1993
  %v1996 = vadd.f32 %v1991, %v1994
  %v1997 = vxor.u32 %v1961, 2147483648
  %v1998 = vmul.f32 %v1997, 1.442695
  %v1999 = vpow.pop %v1998
  %v2000 = vadd.f32 %v1999, 1.0
  %v2001 = vrcp.pop %v2000
  %v2002 = vmul.f32 %v2000, %v2001
  %v2003 = vsub.f32 1.0, %v2002
  %v2004 = vmul.f32 %v2001, %v2003
  %v2005 = vadd.f32 %v2001, %v2004
  %vm2006 = vweird.f32 %v2000
  %vm2007 = vweird.f32 %v2001
  %vm2008 = vmor %vm2006, %vm2007
  %v2009 = vsel %vm2008, %v2001, %v2005
  %v2010 = vand.u32 2147483647, %v2000
  %vm2011 = vcmp.eq.f32.partialorder %v2010, 8.507059e+37
  %v2012 = vand.u32 %v2000, 2147483648
  %v2013 = vor.u32 1.1754944e-38, %v2012
  %v2014 = vsel %vm2011, %v2013, %v2009
  %v2015 = vmul.f32 1.0, %v2014
  %2017 = vrot.lane.b32.xlu0 %v1990, 64
  %v2018 = vpop.permute.xlu0 %2017
  %v2020 = vmul.f32 %v2015, %v2018
  %v2021 = vmax.f32 %v1996, 1.0
  %2023 = vrot.lane.b32.xlu0 %v2021, 64
  %v2024 = vpop.permute.xlu0 %2023
  %v2026 = vrcp.pop %v2024
  %v2027 = vmul.f32 %v2024, %v2026
  %v2028 = vsub.f32 1.0, %v2027
  %v2029 = vmul.f32 %v2026, %v2028
  %v2030 = vadd.f32 %v2026, %v2029
  %vm2031 = vweird.f32 %v2024
  %vm2032 = vweird.f32 %v2026
  %vm2033 = vmor %vm2031, %vm2032
  %v2034 = vsel %vm2033, %v2026, %v2030
  %v2035 = vand.u32 2147483647, %v2024
  %vm2036 = vcmp.eq.f32.partialorder %v2035, 8.507059e+37
  %v2037 = vand.u32 %v2024, 2147483648
  %v2038 = vor.u32 1.1754944e-38, %v2037
  %v2039 = vsel %vm2036, %v2038, %v2034
  %v2040 = vmul.f32 %v2020, %v2039
  %v2041 = vsel %vm122, %v1908, 0
  %2043 = vmatpush.msra.mxu0 0.0
  %2044 = vmatpush.msra.mxu0 0.0
  %2045 = vmatpush.msra.mxu0 0.0
  %2046 = vmatpush.msra.mxu0 0.0
  %2047 = vmatpush.msra.mxu0 0.0
  %2048 = vmatpush.msra.mxu0 0.0
  %2049 = vmatpush.msra.mxu0 0.0
  %2050 = vmatpush.msra.mxu0 0.0
  %2051 = vmatpush.msra.mxu0 0.0
  %2052 = vmatpush.msra.mxu0 0.0
  %2053 = vmatpush.msra.mxu0 0.0
  %2054 = vmatpush.msra.mxu0 0.0
  %2055 = vmatpush.msra.mxu0 %v32
  %2056 = vmatpush.msra.mxu0 %v31
  %2057 = vmatpush.msra.mxu0 %v30
  %2058 = vmatpush.msra.mxu0 %v29
  %2059 = vmatmul.f32.gmra.mxu0 %v2041
  %v2060 = vpop.f32.mrf.mxu0
  %v2061 = vadd.f32 0.0, %v2060
  %2062 = vdwg.mxu0
  %v2063 = vadd.f32 %v388, %v2061
  %v2064 = vadd.f32 %v2063, %v1833
  %2066 = vrot.lane.b32.xlu0 %v2063, 32
  %v2067 = vpop.permute.xlu0 %2066
  %v2069 = vmax.f32 %v2064, %v2067
  %2071 = vrot.lane.b32.xlu0 %v2069, 96
  %v2072 = vpop.permute.xlu0 %2071
  %v2074 = vsub.f32 %v2063, %v2072
  %v2075 = vmul.f32 %v2074, 1.442695
  %v2076 = vpow.pop %v2075
  %v2077 = vsub.f32 %v2064, %v2069
  %v2078 = vmul.f32 %v2077, 1.442695
  %v2079 = vpow.pop %v2078
  %v2080 = vmul.f32 %v2079, %v1855
  %v2081 = vtanh.pop %v2063
  %2083 = vrot.lane.b32.xlu0 %v2081, 64
  %v2084 = vpop.permute.xlu0 %2083
  %v2086 = vmul.f32 %v2076, %v2084
  %2088 = vrot.lane.b32.xlu0 %v2086, 32
  %v2089 = vpop.permute.xlu0 %2088
  %v2091 = vadd.f32 %v2080, %v2089
  %v2092 = vmul.f32 %v2079, %v1861
  %2094 = vrot.lane.b32.xlu0 %v2076, 32
  %v2095 = vpop.permute.xlu0 %2094
  %v2097 = vadd.f32 %v2092, %v2095
  %v2098 = vxor.u32 %v2063, 2147483648
  %v2099 = vmul.f32 %v2098, 1.442695
  %v2100 = vpow.pop %v2099
  %v2101 = vadd.f32 %v2100, 1.0
  %v2102 = vrcp.pop %v2101
  %v2103 = vmul.f32 %v2101, %v2102
  %v2104 = vsub.f32 1.0, %v2103
  %v2105 = vmul.f32 %v2102, %v2104
  %v2106 = vadd.f32 %v2102, %v2105
  %vm2107 = vweird.f32 %v2101
  %vm2108 = vweird.f32 %v2102
  %vm2109 = vmor %vm2107, %vm2108
  %v2110 = vsel %vm2109, %v2102, %v2106
  %v2111 = vand.u32 2147483647, %v2101
  %vm2112 = vcmp.eq.f32.partialorder %v2111, 8.507059e+37
  %v2113 = vand.u32 %v2101, 2147483648
  %v2114 = vor.u32 1.1754944e-38, %v2113
  %v2115 = vsel %vm2112, %v2114, %v2110
  %v2116 = vmul.f32 1.0, %v2115
  %2118 = vrot.lane.b32.xlu0 %v2091, 64
  %v2119 = vpop.permute.xlu0 %2118
  %v2121 = vmul.f32 %v2116, %v2119
  %v2122 = vmax.f32 %v2097, 1.0
  %2124 = vrot.lane.b32.xlu0 %v2122, 64
  %v2125 = vpop.permute.xlu0 %2124
  %v2127 = vrcp.pop %v2125
  %v2128 = vmul.f32 %v2125, %v2127
  %v2129 = vsub.f32 1.0, %v2128
  %v2130 = vmul.f32 %v2127, %v2129
  %v2131 = vadd.f32 %v2127, %v2130
  %vm2132 = vweird.f32 %v2125
  %vm2133 = vweird.f32 %v2127
  %vm2134 = vmor %vm2132, %vm2133
  %v2135 = vsel %vm2134, %v2127, %v2131
  %v2136 = vand.u32 2147483647, %v2125
  %vm2137 = vcmp.eq.f32.partialorder %v2136, 8.507059e+37
  %v2138 = vand.u32 %v2125, 2147483648
  %v2139 = vor.u32 1.1754944e-38, %v2138
  %v2140 = vsel %vm2137, %v2139, %v2135
  %v2141 = vmul.f32 %v2121, %v2140
  %2143 = vrot.lane.b32.xlu0 %v2141, 32
  %v2144 = vpop.permute.xlu0 %2143
  %v2146 = vadd.f32 %v120, %v2144
  %v2147 = vsel %vm122, %v2146, 0.0
  %2148 = vadd.xlane.f32.xlu0 %v2147
  %v2149 = vpop.xlane.xlu0 %2148
  %v2150 = vmul.f32 %v2149, %v153
  %v2151 = vsub.f32 %v2146, %v2150
  %v2152 = vmul.f32 %v2151, %v2151
  %v2153 = vsel %vm122, %v2152, 0.0
  %2154 = vadd.xlane.f32.xlu0 %v2153
  %v2155 = vpop.xlane.xlu0 %2154
  %v2156 = vmul.f32 %v2155, %v153
  %v2157 = vadd.f32 %v2156, 1e-05
  %v2158 = vrsqrt.pop %v2157
  %v2159 = vmul.f32 %v2158, %v2157
  %v2160 = vmul.f32 %v2159, %v2158
  %v2161 = vmul.f32 0.5, %v2160
  %v2162 = vsub.f32 1.5, %v2161
  %v2163 = vmul.f32 %v2158, %v2162
  %vm2164 = vweird.f32 %v2157
  %vm2165 = vweird.f32 %v2158
  %vm2166 = vmor %vm2164, %vm2165
  %v2167 = vsel %vm2166, %v2158, %v2163
  %v2168 = vmul.f32 %v2151, %v2167
  %v2169 = vmul.f32 %v2168, %v518
  %v2170 = vadd.f32 %v2169, %v520
  %2172 = vrot.lane.b32.xlu0 %v2040, 64
  %v2173 = vpop.permute.xlu0 %2172
  %v2175 = vsel %vm122, %v2170, %v2173
  %v2177 = vsel %vm524, %v2175, 0
  %2179 = vmatpush.msra.mxu0 0.0
  %2180 = vmatpush.msra.mxu0 0.0
  %2181 = vmatpush.msra.mxu0 0.0
  %2182 = vmatpush.msra.mxu0 0.0
  %2183 = vmatpush.msra.mxu0 0.0
  %2184 = vmatpush.msra.mxu0 0.0
  %2185 = vmatpush.msra.mxu0 0.0
  %2186 = vmatpush.msra.mxu0 0.0
  %2187 = vmatpush.msra.mxu0 %v40
  %2188 = vmatpush.msra.mxu0 %v39
  %2189 = vmatpush.msra.mxu0 %v38
  %2190 = vmatpush.msra.mxu0 %v37
  %2191 = vmatpush.msra.mxu0 %v36
  %2192 = vmatpush.msra.mxu0 %v35
  %2193 = vmatpush.msra.mxu0 %v34
  %2194 = vmatpush.msra.mxu0 %v33
  %2195 = vmatmul.f32.gmra.mxu0 %v2177
  %v2196 = vpop.f32.mrf.mxu0
  %v2197 = vadd.f32 %v523, %v2196
  %2198 = vdwg.mxu0
  %v2199 = vadd.f32 %v2197, %v1968
  %2201 = vrot.lane.b32.xlu0 %v2197, 32
  %v2202 = vpop.permute.xlu0 %2201
  %v2204 = vmax.f32 %v2199, %v2202
  %2206 = vrot.lane.b32.xlu0 %v2204, 96
  %v2207 = vpop.permute.xlu0 %2206
  %v2209 = vsub.f32 %v2197, %v2207
  %v2210 = vmul.f32 %v2209, 1.442695
  %v2211 = vpow.pop %v2210
  %v2212 = vsub.f32 %v2199, %v2204
  %v2213 = vmul.f32 %v2212, 1.442695
  %v2214 = vpow.pop %v2213
  %v2215 = vmul.f32 %v2214, %v1990
  %v2216 = vtanh.pop %v2197
  %2218 = vrot.lane.b32.xlu0 %v2216, 64
  %v2219 = vpop.permute.xlu0 %2218
  %v2221 = vmul.f32 %v2211, %v2219
  %2223 = vrot.lane.b32.xlu0 %v2221, 32
  %v2224 = vpop.permute.xlu0 %2223
  %v2226 = vadd.f32 %v2215, %v2224
  %v2227 = vmul.f32 %v2214, %v1996
  %2229 = vrot.lane.b32.xlu0 %v2211, 32
  %v2230 = vpop.permute.xlu0 %2229
  %v2232 = vadd.f32 %v2227, %v2230
  %v2233 = vxor.u32 %v2197, 2147483648
  %v2234 = vmul.f32 %v2233, 1.442695
  %v2235 = vpow.pop %v2234
  %v2236 = vadd.f32 %v2235, 1.0
  %v2237 = vrcp.pop %v2236
  %v2238 = vmul.f32 %v2236, %v2237
  %v2239 = vsub.f32 1.0, %v2238
  %v2240 = vmul.f32 %v2237, %v2239
  %v2241 = vadd.f32 %v2237, %v2240
  %vm2242 = vweird.f32 %v2236
  %vm2243 = vweird.f32 %v2237
  %vm2244 = vmor %vm2242, %vm2243
  %v2245 = vsel %vm2244, %v2237, %v2241
  %v2246 = vand.u32 2147483647, %v2236
  %vm2247 = vcmp.eq.f32.partialorder %v2246, 8.507059e+37
  %v2248 = vand.u32 %v2236, 2147483648
  %v2249 = vor.u32 1.1754944e-38, %v2248
  %v2250 = vsel %vm2247, %v2249, %v2245
  %v2251 = vmul.f32 1.0, %v2250
  %2253 = vrot.lane.b32.xlu0 %v2226, 64
  %v2254 = vpop.permute.xlu0 %2253
  %v2256 = vmul.f32 %v2251, %v2254
  %v2257 = vmax.f32 %v2232, 1.0
  %2259 = vrot.lane.b32.xlu0 %v2257, 64
  %v2260 = vpop.permute.xlu0 %2259
  %v2262 = vrcp.pop %v2260
  %v2263 = vmul.f32 %v2260, %v2262
  %v2264 = vsub.f32 1.0, %v2263
  %v2265 = vmul.f32 %v2262, %v2264
  %v2266 = vadd.f32 %v2262, %v2265
  %vm2267 = vweird.f32 %v2260
  %vm2268 = vweird.f32 %v2262
  %vm2269 = vmor %vm2267, %vm2268
  %v2270 = vsel %vm2269, %v2262, %v2266
  %v2271 = vand.u32 2147483647, %v2260
  %vm2272 = vcmp.eq.f32.partialorder %v2271, 8.507059e+37
  %v2273 = vand.u32 %v2260, 2147483648
  %v2274 = vor.u32 1.1754944e-38, %v2273
  %v2275 = vsel %vm2272, %v2274, %v2270
  %v2276 = vmul.f32 %v2256, %v2275
  %2278 = vrot.lane.b32.xlu0 %v2276, 32
  %v2279 = vpop.permute.xlu0 %2278
  %v2281 = vadd.f32 %v2146, %v2279
  %v2282 = vperm.slane %v24, 0
  %v2283 = vmul.f32 %v2281, %v2282
  %vm2284 = vcmask 254976
  %v2285 = vsel %vm2284, %v2283, 0.0
  %2286 = vadd.xlane.f32.xlu0 %v2285
  %v2287 = vpop.xlane.xlu0 %2286
  %s2288 = sld [smem:[#allocation2]]
  %v2289 = vstv %s2288
  %v2290 = vadd.f32 %v2287, %v2289
  %vm2291 = vcmask 1024
  %2292 = vst.msk [vmem:[%s4] sm:$0x3] %vm2291, %v2290
  // Predicated region
  $region18: #{stock_model_forward.1} parent=0 // pred_check
    _
  $region19: #{stock_model_forward.1} parent=0 // pred_check_branch
    %2294 = sbr.rel (0) target = $region21
  $region20: #{stock_model_forward.1} parent=0 // pred_region
    _
  $region21: #{stock_model_forward.1} parent=0 // pred_fallthru
    _
  // Predicated region
  $region22: #{stock_model_forward.1} parent=0 // pred_check
    _
  $region23: #{stock_model_forward.1} parent=0 // pred_check_branch
    %2296 = sbr.rel (0) target = $region25
  $region24: #{stock_model_forward.1} parent=0 // pred_region
    _
  $region25: #{stock_model_forward.1} parent=0 // pred_fallthru
    _

</llo_original>
